<compile_context>
chip_gen: v6e
topology: v6e:2x2x1
jax: 0.10.0
libtpu: 0.0.40
codegen_flags: <defaults>
</compile_context>

<pallas_src>
import jax
import jax.numpy as jnp
from jax.experimental import pallas as pl
from jax.experimental.pallas import tpu as pltpu


def _patch_embed_kernel(x_ref, w_ref, b_ref, o_ref):
    # x_ref: (C, GB, ph, gw, pw)  one block of GB row-bands of one batch item
    # w_ref: (C, ph, pw, Ep)      conv weight, taps-major, embed padded to Ep
    # b_ref: (1, Ep)              bias (padded)
    # o_ref: (GB, gw, Ep)         output patches for this block (lane-dense)
    C, GB, ph, gw, pw = x_ref.shape
    Ep = o_ref.shape[-1]
    # Hoist the bias broadcast out of the loops (JAX does not CSE broadcasts);
    # it also seeds the f32 accumulator so the bias add stays in f32 (v5e).
    bias = jnp.broadcast_to(b_ref[...], (gw, Ep)).astype(jnp.float32)
    for t in range(GB):                  # static unroll: bands in this block
        acc = bias
        for c in range(C):               # static unroll: input channels
            for r in range(ph):          # static unroll: kernel rows
                # (gw, pw) @ (pw, Ep) on the MXU, f32 accumulation.
                acc = acc + jnp.dot(x_ref[c, t, r], w_ref[c, r],
                                    preferred_element_type=jnp.float32)
        o_ref[t] = acc.astype(o_ref.dtype)


def audio_patch_embed(x, weight, bias, patch_size, *, gh_block=None):
    """Equivalent of nn.Conv2d(C, E, kernel_size=patch, stride=patch)(x).

    x:      (B, C, H, W)   float32  (NCHW)
    weight: (E, C, ph, pw) float32  (PyTorch conv weight layout)
    bias:   (E,)           float32
    returns (B, E, H//ph, W//pw) float32 (NCHW)
    """
    ph, pw = patch_size
    B, C, H, W = x.shape
    E = weight.shape[0]
    if H % ph != 0 or W % pw != 0:
        raise ValueError(f"H={H}, W={W} must be divisible by patch {patch_size}")
    gh, gw = H // ph, W // pw

    # Lane-dense output width (multiple of 128).
    Ep = 128 * pl.cdiv(E, 128)
    itemsize = x.dtype.itemsize
    gw_pad = 8 * pl.cdiv(gw, 8)          # sublane padding of the x block
    pw_pad = 128 * pl.cdiv(pw, 128)      # lane padding of the x block

    # Auto-pick how many row-bands per grid step: biggest power-of-two divisor
    # of gh that keeps double-buffered in/out blocks well under scoped VMEM
    # (v7x-safe) and bounds the static unroll of the tap loop.
    if gh_block is None:
        gh_block = 1

        def _blk_bytes(gb):
            x_blk = C * gb * ph * gw_pad * pw_pad * itemsize
            o_blk = gb * gw_pad * Ep * itemsize
            return 2 * (x_blk + o_blk)   # double-buffered input + output

        while (gh % (2 * gh_block) == 0
               and _blk_bytes(2 * gh_block) <= (8 << 20)
               and 2 * gh_block * C * ph <= 128):
            gh_block *= 2
    if gh % gh_block != 0:
        raise ValueError(f"gh_block={gh_block} must divide gh={gh}")

    # Free reshape (no data movement): splits H -> (gh, ph) and W -> (gw, pw).
    x6 = x.reshape(B, C, gh, ph, gw, pw)
    # Tiny weight/bias rearrangement + zero padding of the embed dim.
    w_r = jnp.transpose(weight, (1, 2, 3, 0))            # (C, ph, pw, E)
    w_r = jnp.pad(w_r, ((0, 0), (0, 0), (0, 0), (0, Ep - E)))
    b_r = jnp.pad(bias, (0, Ep - E)).reshape(1, Ep)

    M, K = B * gh * gw, C * ph * pw
    grid = (B, gh // gh_block)

    out = pl.pallas_call(
        _patch_embed_kernel,
        out_shape=jax.ShapeDtypeStruct((B, gh, gw, Ep), x.dtype),
        grid_spec=pl.GridSpec(
            grid=grid,
            in_specs=[
                pl.BlockSpec((None, C, gh_block, ph, gw, pw),
                             lambda b, i: (b, 0, i, 0, 0, 0)),
                pl.BlockSpec((C, ph, pw, Ep), lambda b, i: (0, 0, 0, 0)),
                pl.BlockSpec((1, Ep), lambda b, i: (0, 0)),
            ],
            out_specs=pl.BlockSpec((None, gh_block, gw, Ep),
                                   lambda b, i: (b, i, 0, 0)),
        ),
        compiler_params=pltpu.CompilerParams(
            dimension_semantics=("parallel", "parallel")),
        cost_estimate=pl.CostEstimate(
            flops=2 * M * K * Ep,
            transcendentals=0,
            bytes_accessed=(x6.size + w_r.size + b_r.size + M * Ep) * itemsize),
    )(x6, w_r, b_r)

    out = out[..., :E]                    # drop the lane padding of embed_dim
    # NCHW to match nn.Conv2d's output layout.
    # TODO(synk): downstream CED code immediately flattens to (B, N, E); the
    # (B, gh, gw, E) pallas output could be consumed directly to skip this
    # final XLA permute.
    return jnp.transpose(out, (0, 3, 1, 2))


if __name__ == "__main__":
    # Small shapes consistent with AudioPatchEmbed(input_size=16, patch_size=4,
    # in_chans=4, embed_dim=32): grid_size=(4,4), num_patches=16 per image.
    B, C, H, W = 2, 4, 16, 16
    patch = (4, 4)
    embed_dim = 32

    key = jax.random.PRNGKey(0)
    kx, kw, kb = jax.random.split(key, 3)
    x = jax.random.normal(kx, (B, C, H, W), dtype=jnp.float32)
    weight = jax.random.normal(kw, (embed_dim, C, patch[0], patch[1]),
                               dtype=jnp.float32) * 0.02
    bias = jax.random.normal(kb, (embed_dim,), dtype=jnp.float32) * 0.01

    # Reference: XLA conv (NCHW / OIHW) + bias.
    ref = jax.lax.conv_general_dilated(
        x, weight, window_strides=patch, padding="VALID",
        dimension_numbers=("NCHW", "OIHW", "NCHW")) + bias[None, :, None, None]

    # Exercise single-band blocks, multi-band blocks, and the auto block pick.
    for gb in (1, 2, None):
        out = audio_patch_embed(x, weight, bias, patch, gh_block=gb)
        out = jax.block_until_ready(out)
        assert out.shape == (B, embed_dim, H // patch[0], W // patch[1])
        err = jnp.max(jnp.abs(out - ref))
        assert jnp.allclose(out, ref, atol=1e-3, rtol=1e-3), \
            f"mismatch at gh_block={gb}: max abs err {err}"

    print("KERNEL_OK")
</pallas_src>

<mosaic_0001>
module attributes {stable_mosaic.version = 11 : i64} {
  func.func @_patch_embed_kernel(%arg0: i32, %arg1: i32, %arg2: memref<1x4x1x4x4x4xf32, #tpu.memory_space<vmem>>, %arg3: memref<4x4x4x128xf32, #tpu.memory_space<vmem>>, %arg4: memref<1x128xf32, #tpu.memory_space<vmem>>, %arg5: memref<1x1x4x128xf32, #tpu.memory_space<vmem>>) attributes {dimension_semantics = [#tpu.dimension_semantics<parallel>, #tpu.dimension_semantics<parallel>], iteration_bounds = array<i64: 2, 4>, scalar_prefetch = 0 : i64, scratch_operands = 0 : i64, tpu.core_type = #tpu.core_type<tc>, window_params = [{transform_indices = @transform_0, window_bounds = array<i64: 1, 4, 1, 4, 4, 4>}, {pipeline_mode = #tpu.pipeline_mode<synchronous>, transform_indices = @transform_1, window_bounds = array<i64: 4, 4, 4, 128>}, {pipeline_mode = #tpu.pipeline_mode<synchronous>, transform_indices = @transform_2, window_bounds = array<i64: 1, 128>}, {transform_indices = @transform_3, window_bounds = array<i64: 1, 1, 4, 128>}]} {
    %c0 = arith.constant 0 : index
    %c0_0 = arith.constant 0 : index
    %0 = vector.load %arg4[%c0, %c0_0] : memref<1x128xf32, #tpu.memory_space<vmem>>, vector<1x128xf32>
    %1 = vector.shape_cast %0 : vector<1x128xf32> to vector<1x128xf32>
    %2 = vector.broadcast %1 : vector<1x128xf32> to vector<4x128xf32>
    %c0_1 = arith.constant 0 : index
    %c0_2 = arith.constant 0 : index
    %c0_3 = arith.constant 0 : index
    %c0_4 = arith.constant 0 : index
    %c0_5 = arith.constant 0 : index
    %c0_6 = arith.constant 0 : index
    %3 = vector.load %arg2[%c0_1, %c0_2, %c0_3, %c0_4, %c0_5, %c0_6] : memref<1x4x1x4x4x4xf32, #tpu.memory_space<vmem>>, vector<1x1x1x1x4x4xf32>
    %4 = vector.shape_cast %3 : vector<1x1x1x1x4x4xf32> to vector<4x4xf32>
    %c0_7 = arith.constant 0 : index
    %c0_8 = arith.constant 0 : index
    %c0_9 = arith.constant 0 : index
    %c0_10 = arith.constant 0 : index
    %5 = vector.load %arg3[%c0_7, %c0_8, %c0_9, %c0_10] : memref<4x4x4x128xf32, #tpu.memory_space<vmem>>, vector<1x1x4x128xf32>
    %6 = vector.shape_cast %5 : vector<1x1x4x128xf32> to vector<4x128xf32>
    %cst = arith.constant dense<0.000000e+00> : vector<4x128xf32>
    %7 = tpu.matmul %4, %6, %cst {dimension_numbers = #tpu.dot_dimension_numbers<[1], [0], [0], [1], [0, 0, 1, 1], [], []>} : vector<4x4xf32>, vector<4x128xf32>, vector<4x128xf32> -> vector<4x128xf32>
    %8 = arith.addf %2, %7 : vector<4x128xf32>
    %c0_11 = arith.constant 0 : index
    %c0_12 = arith.constant 0 : index
    %c0_13 = arith.constant 0 : index
    %c1 = arith.constant 1 : index
    %c0_14 = arith.constant 0 : index
    %c0_15 = arith.constant 0 : index
    %9 = vector.load %arg2[%c0_11, %c0_12, %c0_13, %c1, %c0_14, %c0_15] : memref<1x4x1x4x4x4xf32, #tpu.memory_space<vmem>>, vector<1x1x1x1x4x4xf32>
    %10 = vector.shape_cast %9 : vector<1x1x1x1x4x4xf32> to vector<4x4xf32>
    %c0_16 = arith.constant 0 : index
    %c1_17 = arith.constant 1 : index
    %c0_18 = arith.constant 0 : index
    %c0_19 = arith.constant 0 : index
    %11 = vector.load %arg3[%c0_16, %c1_17, %c0_18, %c0_19] : memref<4x4x4x128xf32, #tpu.memory_space<vmem>>, vector<1x1x4x128xf32>
    %12 = vector.shape_cast %11 : vector<1x1x4x128xf32> to vector<4x128xf32>
    %cst_20 = arith.constant dense<0.000000e+00> : vector<4x128xf32>
    %13 = tpu.matmul %10, %12, %cst_20 {dimension_numbers = #tpu.dot_dimension_numbers<[1], [0], [0], [1], [0, 0, 1, 1], [], []>} : vector<4x4xf32>, vector<4x128xf32>, vector<4x128xf32> -> vector<4x128xf32>
    %14 = arith.addf %8, %13 : vector<4x128xf32>
    %c0_21 = arith.constant 0 : index
    %c0_22 = arith.constant 0 : index
    %c0_23 = arith.constant 0 : index
    %c2 = arith.constant 2 : index
    %c0_24 = arith.constant 0 : index
    %c0_25 = arith.constant 0 : index
    %15 = vector.load %arg2[%c0_21, %c0_22, %c0_23, %c2, %c0_24, %c0_25] : memref<1x4x1x4x4x4xf32, #tpu.memory_space<vmem>>, vector<1x1x1x1x4x4xf32>
    %16 = vector.shape_cast %15 : vector<1x1x1x1x4x4xf32> to vector<4x4xf32>
    %c0_26 = arith.constant 0 : index
    %c2_27 = arith.constant 2 : index
    %c0_28 = arith.constant 0 : index
    %c0_29 = arith.constant 0 : index
    %17 = vector.load %arg3[%c0_26, %c2_27, %c0_28, %c0_29] : memref<4x4x4x128xf32, #tpu.memory_space<vmem>>, vector<1x1x4x128xf32>
    %18 = vector.shape_cast %17 : vector<1x1x4x128xf32> to vector<4x128xf32>
    %cst_30 = arith.constant dense<0.000000e+00> : vector<4x128xf32>
    %19 = tpu.matmul %16, %18, %cst_30 {dimension_numbers = #tpu.dot_dimension_numbers<[1], [0], [0], [1], [0, 0, 1, 1], [], []>} : vector<4x4xf32>, vector<4x128xf32>, vector<4x128xf32> -> vector<4x128xf32>
    %20 = arith.addf %14, %19 : vector<4x128xf32>
    %c0_31 = arith.constant 0 : index
    %c0_32 = arith.constant 0 : index
    %c0_33 = arith.constant 0 : index
    %c3 = arith.constant 3 : index
    %c0_34 = arith.constant 0 : index
    %c0_35 = arith.constant 0 : index
    %21 = vector.load %arg2[%c0_31, %c0_32, %c0_33, %c3, %c0_34, %c0_35] : memref<1x4x1x4x4x4xf32, #tpu.memory_space<vmem>>, vector<1x1x1x1x4x4xf32>
    %22 = vector.shape_cast %21 : vector<1x1x1x1x4x4xf32> to vector<4x4xf32>
    %c0_36 = arith.constant 0 : index
    %c3_37 = arith.constant 3 : index
    %c0_38 = arith.constant 0 : index
    %c0_39 = arith.constant 0 : index
    %23 = vector.load %arg3[%c0_36, %c3_37, %c0_38, %c0_39] : memref<4x4x4x128xf32, #tpu.memory_space<vmem>>, vector<1x1x4x128xf32>
    %24 = vector.shape_cast %23 : vector<1x1x4x128xf32> to vector<4x128xf32>
    %cst_40 = arith.constant dense<0.000000e+00> : vector<4x128xf32>
    %25 = tpu.matmul %22, %24, %cst_40 {dimension_numbers = #tpu.dot_dimension_numbers<[1], [0], [0], [1], [0, 0, 1, 1], [], []>} : vector<4x4xf32>, vector<4x128xf32>, vector<4x128xf32> -> vector<4x128xf32>
    %26 = arith.addf %20, %25 : vector<4x128xf32>
    %c0_41 = arith.constant 0 : index
    %c1_42 = arith.constant 1 : index
    %c0_43 = arith.constant 0 : index
    %c0_44 = arith.constant 0 : index
    %c0_45 = arith.constant 0 : index
    %c0_46 = arith.constant 0 : index
    %27 = vector.load %arg2[%c0_41, %c1_42, %c0_43, %c0_44, %c0_45, %c0_46] : memref<1x4x1x4x4x4xf32, #tpu.memory_space<vmem>>, vector<1x1x1x1x4x4xf32>
    %28 = vector.shape_cast %27 : vector<1x1x1x1x4x4xf32> to vector<4x4xf32>
    %c1_47 = arith.constant 1 : index
    %c0_48 = arith.constant 0 : index
    %c0_49 = arith.constant 0 : index
    %c0_50 = arith.constant 0 : index
    %29 = vector.load %arg3[%c1_47, %c0_48, %c0_49, %c0_50] : memref<4x4x4x128xf32, #tpu.memory_space<vmem>>, vector<1x1x4x128xf32>
    %30 = vector.shape_cast %29 : vector<1x1x4x128xf32> to vector<4x128xf32>
    %cst_51 = arith.constant dense<0.000000e+00> : vector<4x128xf32>
    %31 = tpu.matmul %28, %30, %cst_51 {dimension_numbers = #tpu.dot_dimension_numbers<[1], [0], [0], [1], [0, 0, 1, 1], [], []>} : vector<4x4xf32>, vector<4x128xf32>, vector<4x128xf32> -> vector<4x128xf32>
    %32 = arith.addf %26, %31 : vector<4x128xf32>
    %c0_52 = arith.constant 0 : index
    %c1_53 = arith.constant 1 : index
    %c0_54 = arith.constant 0 : index
    %c1_55 = arith.constant 1 : index
    %c0_56 = arith.constant 0 : index
    %c0_57 = arith.constant 0 : index
    %33 = vector.load %arg2[%c0_52, %c1_53, %c0_54, %c1_55, %c0_56, %c0_57] : memref<1x4x1x4x4x4xf32, #tpu.memory_space<vmem>>, vector<1x1x1x1x4x4xf32>
    %34 = vector.shape_cast %33 : vector<1x1x1x1x4x4xf32> to vector<4x4xf32>
    %c1_58 = arith.constant 1 : index
    %c1_59 = arith.constant 1 : index
    %c0_60 = arith.constant 0 : index
    %c0_61 = arith.constant 0 : index
    %35 = vector.load %arg3[%c1_58, %c1_59, %c0_60, %c0_61] : memref<4x4x4x128xf32, #tpu.memory_space<vmem>>, vector<1x1x4x128xf32>
    %36 = vector.shape_cast %35 : vector<1x1x4x128xf32> to vector<4x128xf32>
    %cst_62 = arith.constant dense<0.000000e+00> : vector<4x128xf32>
    %37 = tpu.matmul %34, %36, %cst_62 {dimension_numbers = #tpu.dot_dimension_numbers<[1], [0], [0], [1], [0, 0, 1, 1], [], []>} : vector<4x4xf32>, vector<4x128xf32>, vector<4x128xf32> -> vector<4x128xf32>
    %38 = arith.addf %32, %37 : vector<4x128xf32>
    %c0_63 = arith.constant 0 : index
    %c1_64 = arith.constant 1 : index
    %c0_65 = arith.constant 0 : index
    %c2_66 = arith.constant 2 : index
    %c0_67 = arith.constant 0 : index
    %c0_68 = arith.constant 0 : index
    %39 = vector.load %arg2[%c0_63, %c1_64, %c0_65, %c2_66, %c0_67, %c0_68] : memref<1x4x1x4x4x4xf32, #tpu.memory_space<vmem>>, vector<1x1x1x1x4x4xf32>
    %40 = vector.shape_cast %39 : vector<1x1x1x1x4x4xf32> to vector<4x4xf32>
    %c1_69 = arith.constant 1 : index
    %c2_70 = arith.constant 2 : index
    %c0_71 = arith.constant 0 : index
    %c0_72 = arith.constant 0 : index
    %41 = vector.load %arg3[%c1_69, %c2_70, %c0_71, %c0_72] : memref<4x4x4x128xf32, #tpu.memory_space<vmem>>, vector<1x1x4x128xf32>
    %42 = vector.shape_cast %41 : vector<1x1x4x128xf32> to vector<4x128xf32>
    %cst_73 = arith.constant dense<0.000000e+00> : vector<4x128xf32>
    %43 = tpu.matmul %40, %42, %cst_73 {dimension_numbers = #tpu.dot_dimension_numbers<[1], [0], [0], [1], [0, 0, 1, 1], [], []>} : vector<4x4xf32>, vector<4x128xf32>, vector<4x128xf32> -> vector<4x128xf32>
    %44 = arith.addf %38, %43 : vector<4x128xf32>
    %c0_74 = arith.constant 0 : index
    %c1_75 = arith.constant 1 : index
    %c0_76 = arith.constant 0 : index
    %c3_77 = arith.constant 3 : index
    %c0_78 = arith.constant 0 : index
    %c0_79 = arith.constant 0 : index
    %45 = vector.load %arg2[%c0_74, %c1_75, %c0_76, %c3_77, %c0_78, %c0_79] : memref<1x4x1x4x4x4xf32, #tpu.memory_space<vmem>>, vector<1x1x1x1x4x4xf32>
    %46 = vector.shape_cast %45 : vector<1x1x1x1x4x4xf32> to vector<4x4xf32>
    %c1_80 = arith.constant 1 : index
    %c3_81 = arith.constant 3 : index
    %c0_82 = arith.constant 0 : index
    %c0_83 = arith.constant 0 : index
    %47 = vector.load %arg3[%c1_80, %c3_81, %c0_82, %c0_83] : memref<4x4x4x128xf32, #tpu.memory_space<vmem>>, vector<1x1x4x128xf32>
    %48 = vector.shape_cast %47 : vector<1x1x4x128xf32> to vector<4x128xf32>
    %cst_84 = arith.constant dense<0.000000e+00> : vector<4x128xf32>
    %49 = tpu.matmul %46, %48, %cst_84 {dimension_numbers = #tpu.dot_dimension_numbers<[1], [0], [0], [1], [0, 0, 1, 1], [], []>} : vector<4x4xf32>, vector<4x128xf32>, vector<4x128xf32> -> vector<4x128xf32>
    %50 = arith.addf %44, %49 : vector<4x128xf32>
    %c0_85 = arith.constant 0 : index
    %c2_86 = arith.constant 2 : index
    %c0_87 = arith.constant 0 : index
    %c0_88 = arith.constant 0 : index
    %c0_89 = arith.constant 0 : index
    %c0_90 = arith.constant 0 : index
    %51 = vector.load %arg2[%c0_85, %c2_86, %c0_87, %c0_88, %c0_89, %c0_90] : memref<1x4x1x4x4x4xf32, #tpu.memory_space<vmem>>, vector<1x1x1x1x4x4xf32>
    %52 = vector.shape_cast %51 : vector<1x1x1x1x4x4xf32> to vector<4x4xf32>
    %c2_91 = arith.constant 2 : index
    %c0_92 = arith.constant 0 : index
    %c0_93 = arith.constant 0 : index
    %c0_94 = arith.constant 0 : index
    %53 = vector.load %arg3[%c2_91, %c0_92, %c0_93, %c0_94] : memref<4x4x4x128xf32, #tpu.memory_space<vmem>>, vector<1x1x4x128xf32>
    %54 = vector.shape_cast %53 : vector<1x1x4x128xf32> to vector<4x128xf32>
    %cst_95 = arith.constant dense<0.000000e+00> : vector<4x128xf32>
    %55 = tpu.matmul %52, %54, %cst_95 {dimension_numbers = #tpu.dot_dimension_numbers<[1], [0], [0], [1], [0, 0, 1, 1], [], []>} : vector<4x4xf32>, vector<4x128xf32>, vector<4x128xf32> -> vector<4x128xf32>
    %56 = arith.addf %50, %55 : vector<4x128xf32>
    %c0_96 = arith.constant 0 : index
    %c2_97 = arith.constant 2 : index
    %c0_98 = arith.constant 0 : index
    %c1_99 = arith.constant 1 : index
    %c0_100 = arith.constant 0 : index
    %c0_101 = arith.constant 0 : index
    %57 = vector.load %arg2[%c0_96, %c2_97, %c0_98, %c1_99, %c0_100, %c0_101] : memref<1x4x1x4x4x4xf32, #tpu.memory_space<vmem>>, vector<1x1x1x1x4x4xf32>
    %58 = vector.shape_cast %57 : vector<1x1x1x1x4x4xf32> to vector<4x4xf32>
    %c2_102 = arith.constant 2 : index
    %c1_103 = arith.constant 1 : index
    %c0_104 = arith.constant 0 : index
    %c0_105 = arith.constant 0 : index
    %59 = vector.load %arg3[%c2_102, %c1_103, %c0_104, %c0_105] : memref<4x4x4x128xf32, #tpu.memory_space<vmem>>, vector<1x1x4x128xf32>
    %60 = vector.shape_cast %59 : vector<1x1x4x128xf32> to vector<4x128xf32>
    %cst_106 = arith.constant dense<0.000000e+00> : vector<4x128xf32>
    %61 = tpu.matmul %58, %60, %cst_106 {dimension_numbers = #tpu.dot_dimension_numbers<[1], [0], [0], [1], [0, 0, 1, 1], [], []>} : vector<4x4xf32>, vector<4x128xf32>, vector<4x128xf32> -> vector<4x128xf32>
    %62 = arith.addf %56, %61 : vector<4x128xf32>
    %c0_107 = arith.constant 0 : index
    %c2_108 = arith.constant 2 : index
    %c0_109 = arith.constant 0 : index
    %c2_110 = arith.constant 2 : index
    %c0_111 = arith.constant 0 : index
    %c0_112 = arith.constant 0 : index
    %63 = vector.load %arg2[%c0_107, %c2_108, %c0_109, %c2_110, %c0_111, %c0_112] : memref<1x4x1x4x4x4xf32, #tpu.memory_space<vmem>>, vector<1x1x1x1x4x4xf32>
    %64 = vector.shape_cast %63 : vector<1x1x1x1x4x4xf32> to vector<4x4xf32>
    %c2_113 = arith.constant 2 : index
    %c2_114 = arith.constant 2 : index
    %c0_115 = arith.constant 0 : index
    %c0_116 = arith.constant 0 : index
    %65 = vector.load %arg3[%c2_113, %c2_114, %c0_115, %c0_116] : memref<4x4x4x128xf32, #tpu.memory_space<vmem>>, vector<1x1x4x128xf32>
    %66 = vector.shape_cast %65 : vector<1x1x4x128xf32> to vector<4x128xf32>
    %cst_117 = arith.constant dense<0.000000e+00> : vector<4x128xf32>
    %67 = tpu.matmul %64, %66, %cst_117 {dimension_numbers = #tpu.dot_dimension_numbers<[1], [0], [0], [1], [0, 0, 1, 1], [], []>} : vector<4x4xf32>, vector<4x128xf32>, vector<4x128xf32> -> vector<4x128xf32>
    %68 = arith.addf %62, %67 : vector<4x128xf32>
    %c0_118 = arith.constant 0 : index
    %c2_119 = arith.constant 2 : index
    %c0_120 = arith.constant 0 : index
    %c3_121 = arith.constant 3 : index
    %c0_122 = arith.constant 0 : index
    %c0_123 = arith.constant 0 : index
    %69 = vector.load %arg2[%c0_118, %c2_119, %c0_120, %c3_121, %c0_122, %c0_123] : memref<1x4x1x4x4x4xf32, #tpu.memory_space<vmem>>, vector<1x1x1x1x4x4xf32>
    %70 = vector.shape_cast %69 : vector<1x1x1x1x4x4xf32> to vector<4x4xf32>
    %c2_124 = arith.constant 2 : index
    %c3_125 = arith.constant 3 : index
    %c0_126 = arith.constant 0 : index
    %c0_127 = arith.constant 0 : index
    %71 = vector.load %arg3[%c2_124, %c3_125, %c0_126, %c0_127] : memref<4x4x4x128xf32, #tpu.memory_space<vmem>>, vector<1x1x4x128xf32>
    %72 = vector.shape_cast %71 : vector<1x1x4x128xf32> to vector<4x128xf32>
    %cst_128 = arith.constant dense<0.000000e+00> : vector<4x128xf32>
    %73 = tpu.matmul %70, %72, %cst_128 {dimension_numbers = #tpu.dot_dimension_numbers<[1], [0], [0], [1], [0, 0, 1, 1], [], []>} : vector<4x4xf32>, vector<4x128xf32>, vector<4x128xf32> -> vector<4x128xf32>
    %74 = arith.addf %68, %73 : vector<4x128xf32>
    %c0_129 = arith.constant 0 : index
    %c3_130 = arith.constant 3 : index
    %c0_131 = arith.constant 0 : index
    %c0_132 = arith.constant 0 : index
    %c0_133 = arith.constant 0 : index
    %c0_134 = arith.constant 0 : index
    %75 = vector.load %arg2[%c0_129, %c3_130, %c0_131, %c0_132, %c0_133, %c0_134] : memref<1x4x1x4x4x4xf32, #tpu.memory_space<vmem>>, vector<1x1x1x1x4x4xf32>
    %76 = vector.shape_cast %75 : vector<1x1x1x1x4x4xf32> to vector<4x4xf32>
    %c3_135 = arith.constant 3 : index
    %c0_136 = arith.constant 0 : index
    %c0_137 = arith.constant 0 : index
    %c0_138 = arith.constant 0 : index
    %77 = vector.load %arg3[%c3_135, %c0_136, %c0_137, %c0_138] : memref<4x4x4x128xf32, #tpu.memory_space<vmem>>, vector<1x1x4x128xf32>
    %78 = vector.shape_cast %77 : vector<1x1x4x128xf32> to vector<4x128xf32>
    %cst_139 = arith.constant dense<0.000000e+00> : vector<4x128xf32>
    %79 = tpu.matmul %76, %78, %cst_139 {dimension_numbers = #tpu.dot_dimension_numbers<[1], [0], [0], [1], [0, 0, 1, 1], [], []>} : vector<4x4xf32>, vector<4x128xf32>, vector<4x128xf32> -> vector<4x128xf32>
    %80 = arith.addf %74, %79 : vector<4x128xf32>
    %c0_140 = arith.constant 0 : index
    %c3_141 = arith.constant 3 : index
    %c0_142 = arith.constant 0 : index
    %c1_143 = arith.constant 1 : index
    %c0_144 = arith.constant 0 : index
    %c0_145 = arith.constant 0 : index
    %81 = vector.load %arg2[%c0_140, %c3_141, %c0_142, %c1_143, %c0_144, %c0_145] : memref<1x4x1x4x4x4xf32, #tpu.memory_space<vmem>>, vector<1x1x1x1x4x4xf32>
    %82 = vector.shape_cast %81 : vector<1x1x1x1x4x4xf32> to vector<4x4xf32>
    %c3_146 = arith.constant 3 : index
    %c1_147 = arith.constant 1 : index
    %c0_148 = arith.constant 0 : index
    %c0_149 = arith.constant 0 : index
    %83 = vector.load %arg3[%c3_146, %c1_147, %c0_148, %c0_149] : memref<4x4x4x128xf32, #tpu.memory_space<vmem>>, vector<1x1x4x128xf32>
    %84 = vector.shape_cast %83 : vector<1x1x4x128xf32> to vector<4x128xf32>
    %cst_150 = arith.constant dense<0.000000e+00> : vector<4x128xf32>
    %85 = tpu.matmul %82, %84, %cst_150 {dimension_numbers = #tpu.dot_dimension_numbers<[1], [0], [0], [1], [0, 0, 1, 1], [], []>} : vector<4x4xf32>, vector<4x128xf32>, vector<4x128xf32> -> vector<4x128xf32>
    %86 = arith.addf %80, %85 : vector<4x128xf32>
    %c0_151 = arith.constant 0 : index
    %c3_152 = arith.constant 3 : index
    %c0_153 = arith.constant 0 : index
    %c2_154 = arith.constant 2 : index
    %c0_155 = arith.constant 0 : index
    %c0_156 = arith.constant 0 : index
    %87 = vector.load %arg2[%c0_151, %c3_152, %c0_153, %c2_154, %c0_155, %c0_156] : memref<1x4x1x4x4x4xf32, #tpu.memory_space<vmem>>, vector<1x1x1x1x4x4xf32>
    %88 = vector.shape_cast %87 : vector<1x1x1x1x4x4xf32> to vector<4x4xf32>
    %c3_157 = arith.constant 3 : index
    %c2_158 = arith.constant 2 : index
    %c0_159 = arith.constant 0 : index
    %c0_160 = arith.constant 0 : index
    %89 = vector.load %arg3[%c3_157, %c2_158, %c0_159, %c0_160] : memref<4x4x4x128xf32, #tpu.memory_space<vmem>>, vector<1x1x4x128xf32>
    %90 = vector.shape_cast %89 : vector<1x1x4x128xf32> to vector<4x128xf32>
    %cst_161 = arith.constant dense<0.000000e+00> : vector<4x128xf32>
    %91 = tpu.matmul %88, %90, %cst_161 {dimension_numbers = #tpu.dot_dimension_numbers<[1], [0], [0], [1], [0, 0, 1, 1], [], []>} : vector<4x4xf32>, vector<4x128xf32>, vector<4x128xf32> -> vector<4x128xf32>
    %92 = arith.addf %86, %91 : vector<4x128xf32>
    %c0_162 = arith.constant 0 : index
    %c3_163 = arith.constant 3 : index
    %c0_164 = arith.constant 0 : index
    %c3_165 = arith.constant 3 : index
    %c0_166 = arith.constant 0 : index
    %c0_167 = arith.constant 0 : index
    %93 = vector.load %arg2[%c0_162, %c3_163, %c0_164, %c3_165, %c0_166, %c0_167] : memref<1x4x1x4x4x4xf32, #tpu.memory_space<vmem>>, vector<1x1x1x1x4x4xf32>
    %94 = vector.shape_cast %93 : vector<1x1x1x1x4x4xf32> to vector<4x4xf32>
    %c3_168 = arith.constant 3 : index
    %c3_169 = arith.constant 3 : index
    %c0_170 = arith.constant 0 : index
    %c0_171 = arith.constant 0 : index
    %95 = vector.load %arg3[%c3_168, %c3_169, %c0_170, %c0_171] : memref<4x4x4x128xf32, #tpu.memory_space<vmem>>, vector<1x1x4x128xf32>
    %96 = vector.shape_cast %95 : vector<1x1x4x128xf32> to vector<4x128xf32>
    %cst_172 = arith.constant dense<0.000000e+00> : vector<4x128xf32>
    %97 = tpu.matmul %94, %96, %cst_172 {dimension_numbers = #tpu.dot_dimension_numbers<[1], [0], [0], [1], [0, 0, 1, 1], [], []>} : vector<4x4xf32>, vector<4x128xf32>, vector<4x128xf32> -> vector<4x128xf32>
    %98 = arith.addf %92, %97 : vector<4x128xf32>
    %c0_173 = arith.constant 0 : index
    %c0_174 = arith.constant 0 : index
    %c0_175 = arith.constant 0 : index
    %c0_176 = arith.constant 0 : index
    %99 = vector.load %arg5[%c0_173, %c0_174, %c0_175, %c0_176] : memref<1x1x4x128xf32, #tpu.memory_space<vmem>>, vector<1x1x4x128xf32>
    %100 = vector.shape_cast %99 : vector<1x1x4x128xf32> to vector<4x128xf32>
    %101 = vector.shape_cast %98 : vector<4x128xf32> to vector<1x1x4x128xf32>
    tpu.vector_store %arg5[%c0_173, %c0_174, %c0_175, %c0_176], %101 {strides = array<i32>} : memref<1x1x4x128xf32, #tpu.memory_space<vmem>>, vector<1x1x4x128xf32>,
    return
  }
  func.func @transform_0(%arg0: i32, %arg1: i32) -> (i32, i32, i32, i32, i32, i32) {
    %c0_i32 = arith.constant 0 : i32
    %c0_i32_0 = arith.constant 0 : i32
    %c0_i32_1 = arith.constant 0 : i32
    %c0_i32_2 = arith.constant 0 : i32
    %c0_i32_3 = arith.constant 0 : i32
    return %arg0, %c0_i32, %arg1, %c0_i32_0, %c0_i32_1, %c0_i32_2 : i32, i32, i32, i32, i32, i32
  }
  func.func @transform_1(%arg0: i32, %arg1: i32) -> (i32, i32, i32, i32) {
    %c0_i32 = arith.constant 0 : i32
    %c0_i32_0 = arith.constant 0 : i32
    %c0_i32_1 = arith.constant 0 : i32
    %c0_i32_2 = arith.constant 0 : i32
    %c0_i32_3 = arith.constant 0 : i32
    return %c0_i32, %c0_i32_0, %c0_i32_1, %c0_i32_2 : i32, i32, i32, i32
  }
  func.func @transform_2(%arg0: i32, %arg1: i32) -> (i32, i32) {
    %c0_i32 = arith.constant 0 : i32
    %c0_i32_0 = arith.constant 0 : i32
    %c0_i32_1 = arith.constant 0 : i32
    return %c0_i32, %c0_i32_0 : i32, i32
  }
  func.func @transform_3(%arg0: i32, %arg1: i32) -> (i32, i32, i32, i32) {
    %c0_i32 = arith.constant 0 : i32
    %c0_i32_0 = arith.constant 0 : i32
    %c0_i32_1 = arith.constant 0 : i32
    return %arg0, %arg1, %c0_i32, %c0_i32_0 : i32, i32, i32, i32
  }
}

</mosaic_0001>

<llo_original>
// kernel: tpu_custom_call.1
$region0: #{tpu_custom_call.1}
  #allocation0 [shape = 'u32[]', space=smem, size = 0x4, offset = 0x4, fixed_abs, tag = 'smem constant byte address 0x4 - core index']
  #allocation1 [shape = 'u32[144,128]{1,0:T(1,128)}', space=vmem, size = 0x12000, scoped, tag = 'internal scratch']
  #allocation8 [shape = 's32[]', space=sflag, size = 0x4, offset = 0, fixed_abs, tag = 'sflag constant byte address 0x0 - dummy sync flag']
  %s0 = inlined_call_operand.hbm [shape: f32[2,4,4,4,4,4], index: 0, kind: input, shape index: {}]
  %s1 = inlined_call_operand.hbm [shape: f32[4,4,4,128], index: 1, kind: input, shape index: {}]
  %s2 = inlined_call_operand.vmem [shape: f32[1,128], index: 2, kind: input, shape index: {}]
  %s3 = inlined_call_operand.hbm [shape: f32[2,4,4,128], index: 3, kind: output, shape index: {}]
  %s4 = sld [smem:[#allocation0]]
  $region53: #{tpu_custom_call.1} parent=0
    _
  %s6 = ssub.s32 1, %s4
  %s7 = scalar_select 0, %s6, %s4
  $region1: #{tpu_custom_call.1} parent=0
    #allocation2 [shape = 'u8[65536]{0}', space=vmem, size = 0x10000, scoped, tag = 'input window, operand 0']
    #allocation3 [shape = 's32[2]{0}', space=sflag, size = 0x8, scoped, tag = 'scoped memory for tpu_custom_call.1']
    #allocation4 [shape = 's32[2]{0}', space=sflag, size = 0x8, scoped, tag = 'scoped memory for tpu_custom_call.1']
    #allocation5 [shape = 'u8[32768]{0}', space=vmem, size = 0x8000, scoped, tag = 'input window, operand 1, single buffered']
    #allocation6 [shape = 's32[1]{0}', space=sflag, size = 0x4, scoped, tag = 'scoped memory for tpu_custom_call.1']
    #allocation7 [shape = 'u8[4096]{0}', space=vmem, size = 0x1000, scoped, tag = 'output window, operand 0']
    %8 = vsyncpa [#allocation3], 0
    %s9 = scalar_lea.sflag [#allocation3], 1
    %10 = vsyncpa %s9, 0
    %11 = vsyncpa [#allocation6], 0
    %12 = vsyncpa [#allocation4], 0
    %s13 = scalar_lea.sflag [#allocation4], 1
    %14 = vsyncpa %s13, 0
    loop: start=0, step=1, limit=10
    $region2: #{tpu_custom_call.1} parent=1 // loop_pre_header
      _
    $region3: #{tpu_custom_call.1} parent=1 // loop_header
      %s16 = sphi 0, %s20
      %p17 = scmp.ge.s32.totalorder %s16, 10
      %s23 = sphi 0, %s35
      %s24 = sphi 0, %s31
      %s25 = sphi 0, %s23
      %s26 = sphi 0, %s24
      %s27 = sphi 0, %s25
      %s28 = sphi 0, %s26
      %s40 = sphi 0, %s42
      %s43 = sphi 0, %s40
      %s44 = sphi 0, %s43
      %s60 = sphi 0, %s44
      %s64 = sphi 0, %s64
      %s66 = sphi 0, %s64
      %s67 = sphi 0, %s66
      %s81 = sphi 0, %s67
      %s85 = sphi 0, %s85
      %s87 = sphi 0, %s85
      %s88 = sphi 0, %s87
      %s102 = sphi 0, %s88
      %s110 = sphi 0, %s112
      %s113 = sphi 0, %s110
      %s114 = sphi 0, %s113
      %s130 = sphi 0, %s114
    $region4: #{tpu_custom_call.1} parent=1 // loop_header_branch
      %19 = sbr.rel (%p17) target = $region8
    $region5: #{tpu_custom_call.1} parent=1 // loop_body
      %s21 = ssub.s32 %s16, 1
      %s22 = ssub.s32 %s16, 2
      %s29 = sadd.s32 1, %s24
      %p30 = scmp.ge.s32.totalorder %s29, 4
      %s31 = scalar_select %p30, 0, %s29
      %s32 = sadd.s32 1, %s23
      %s33 = scalar_select %p30, %s32, %s23
      %p34 = scmp.ge.s32.totalorder %s33, 2
      %s35 = scalar_select %p34, 0, %s33
      %s36 = ssub.s32 %s23, %s35
      %s37 = ssub.s32 %s24, %s31
      %s38 = sor.u32 %s36, %s37
      %p39 = scmp.eq.s32.totalorder %s38, 0
      %s41 = sadd.s32 %s40, 1
      %s42 = scalar_select %p39, %s40, %s41
      %p45 = pneg %p39
      %p46 = scmp.eq.s32.totalorder %s16, 7
      %p47 = por %p45, %p46
      %p48 = scmp.ne.s32.totalorder %s40, %s43
      %p49 = scmp.eq.s32.totalorder %s16, 0
      %p50 = por %p48, %p49
      %p51 = scmp.ne.s32.totalorder %s40, %s43
      %p52 = scmp.eq.s32.totalorder %s21, 7
      %p53 = por %p51, %p52
      %p54 = scmp.ne.s32.totalorder %s43, %s44
      %p55 = scmp.eq.s32.totalorder %s21, 0
      %p56 = por %p54, %p55
      %p57 = scmp.ne.s32.totalorder %s43, %s44
      %p58 = scmp.eq.s32.totalorder %s22, 7
      %p59 = por %p57, %p58
      %p61 = scmp.ne.s32.totalorder %s44, %s60
      %p62 = scmp.eq.s32.totalorder %s22, 0
      %p63 = por %p61, %p62
      %s65 = sadd.s32 %s64, 1
      %p68 = scmp.eq.s32.totalorder %s16, 7
      %p69 = scmp.ne.s32.totalorder %s64, %s66
      %p70 = scmp.eq.s32.totalorder %s16, 0
      %p71 = por %p69, %p70
      %p72 = scmp.ne.s32.totalorder %s64, %s66
      %p73 = scmp.eq.s32.totalorder %s21, 7
      %p74 = por %p72, %p73
      %p75 = scmp.ne.s32.totalorder %s66, %s67
      %p76 = scmp.eq.s32.totalorder %s21, 0
      %p77 = por %p75, %p76
      %p78 = scmp.ne.s32.totalorder %s66, %s67
      %p79 = scmp.eq.s32.totalorder %s22, 7
      %p80 = por %p78, %p79
      %p82 = scmp.ne.s32.totalorder %s67, %s81
      %p83 = scmp.eq.s32.totalorder %s22, 0
      %p84 = por %p82, %p83
      %s86 = sadd.s32 %s85, 1
      %p89 = scmp.eq.s32.totalorder %s16, 7
      %p90 = scmp.ne.s32.totalorder %s85, %s87
      %p91 = scmp.eq.s32.totalorder %s16, 0
      %p92 = por %p90, %p91
      %p93 = scmp.ne.s32.totalorder %s85, %s87
      %p94 = scmp.eq.s32.totalorder %s21, 7
      %p95 = por %p93, %p94
      %p96 = scmp.ne.s32.totalorder %s87, %s88
      %p97 = scmp.eq.s32.totalorder %s21, 0
      %p98 = por %p96, %p97
      %p99 = scmp.ne.s32.totalorder %s87, %s88
      %p100 = scmp.eq.s32.totalorder %s22, 7
      %p101 = por %p99, %p100
      %p103 = scmp.ne.s32.totalorder %s88, %s102
      %p104 = scmp.eq.s32.totalorder %s22, 0
      %p105 = por %p103, %p104
      %s106 = ssub.s32 %s23, %s35
      %s107 = ssub.s32 %s24, %s31
      %s108 = sor.u32 %s106, %s107
      %p109 = scmp.eq.s32.totalorder %s108, 0
      %s111 = sadd.s32 %s110, 1
      %s112 = scalar_select %p109, %s110, %s111
      %p115 = pneg %p109
      %p116 = scmp.eq.s32.totalorder %s16, 7
      %p117 = por %p115, %p116
      %p118 = scmp.ne.s32.totalorder %s110, %s113
      %p119 = scmp.eq.s32.totalorder %s16, 0
      %p120 = por %p118, %p119
      %p121 = scmp.ne.s32.totalorder %s110, %s113
      %p122 = scmp.eq.s32.totalorder %s21, 7
      %p123 = por %p121, %p122
      %p124 = scmp.ne.s32.totalorder %s113, %s114
      %p125 = scmp.eq.s32.totalorder %s21, 0
      %p126 = por %p124, %p125
      %p127 = scmp.ne.s32.totalorder %s113, %s114
      %p128 = scmp.eq.s32.totalorder %s22, 7
      %p129 = por %p127, %p128
      %p131 = scmp.ne.s32.totalorder %s114, %s130
      %p132 = scmp.eq.s32.totalorder %s22, 0
      %p133 = por %p131, %p132
      %p134 = scmp.le.s32.totalorder 1, %s16
      %p135 = scmp.lt.s32.totalorder %s16, 9
      %p136 = pnand %p134, %p135
      %p137 = pneg %p136
      // Predicated region
      $region9: #{tpu_custom_call.1} parent=5 // pred_check
        _
      $region10: #{tpu_custom_call.1} parent=5 // pred_check_branch
        %139 = sbr.rel (%p136) target = $region12
      $region11: #{tpu_custom_call.1} parent=5 // pred_region
        %s140 = ssub.s32 %s16, 1
        // Predicated region
        $region13: #{tpu_custom_call.1} parent=11 // pred_check
          %p141 = pneg %p77
        $region14: #{tpu_custom_call.1} parent=11 // pred_check_branch
          %143 = sbr.rel (%p141) target = $region16
        $region15: #{tpu_custom_call.1} parent=11 // pred_region
          %s145 = ssub.s32 1024, 1024
          %146 = vsyncadd [#allocation6], %s145
          %s147 = sshll.u32 [#allocation5], 4
          %s148 = int_to_ptr.vmem [resolvable:$true] %s147
          %153 = dma.hbm_to_vmem [thread:$0]  %s1, 1024, %s148, [#allocation6], 64, 64, 4
        $region16: #{tpu_custom_call.1} parent=11 // pred_fallthru
          _
        // Predicated region
        $region17: #{tpu_custom_call.1} parent=11 // pred_check
          %p154 = pneg %p98
        $region18: #{tpu_custom_call.1} parent=11 // pred_check_branch
          %156 = sbr.rel (%p154) target = $region20
        $region19: #{tpu_custom_call.1} parent=11 // pred_region
          _
        $region20: #{tpu_custom_call.1} parent=11 // pred_fallthru
          _
      $region12: #{tpu_custom_call.1} parent=5 // pred_fallthru
        _
      %p157 = scmp.lt.s32.totalorder %s16, 8
      // Predicated region
      $region21: #{tpu_custom_call.1} parent=5 // pred_check
        %p158 = pneg %p157
      $region22: #{tpu_custom_call.1} parent=5 // pred_check_branch
        %160 = sbr.rel (%p158) target = $region24
      $region23: #{tpu_custom_call.1} parent=5 // pred_region
        // Predicated region
        $region25: #{tpu_custom_call.1} parent=23 // pred_check
          %p161 = pneg %p50
        $region26: #{tpu_custom_call.1} parent=23 // pred_check_branch
          %163 = sbr.rel (%p161) target = $region28
        $region27: #{tpu_custom_call.1} parent=23 // pred_region
          #allocation9 [shape = 'u32[6]{0}', space=smem, size = 0x18, scoped, tag = 'DMA stride descriptor']
          %s164 = sand.u32 %s40, 1
          %s165 = scalar_lea.sflag [#allocation3], %s164
          %s166 = sand.u32 %s40, 1
          %s167 = smul.addr %s166, 64
          %s168 = scalar_lea.vmem [#allocation2], %s167
          %s170 = ssub.s32 1024, 1024
          %171 = vsyncadd %s165, %s170
          %s172 = smul.addr %s24, 4
          %s173 = smul.addr %s23, 64
          %s174 = sadd.s32 %s172, %s173
          %s175 = smul.addr %s174, 64
          %s176 = scalar_lea.hbm %s0, %s175
          %s178 = sshll.u32 1, 14
          %s179 = sxor.u32 4294967295, %s178
          %s181 = sld [smem:[#allocation0]]
          %s182 = sadd.s32 2, %s181
          %s184 = sshll.u32 7, 26
          %s185 = sxor.u32 4294967295, %s184
          %s186 = sand.u32 0, %s185
          %s187 = sshll.u32 %s182, 26
          %s188 = sor.u32 %s186, %s187
          %s189 = sshll.u32 %s168, 4
          %s190 = int_to_ptr.vmem [resolvable:$true] %s189
          %196 = sst [smem:[#allocation9]] 1024
          %s197 = scalar_lea.smem [#allocation9], 1
          %198 = sst [smem:[%s197]] 256
          %s199 = scalar_lea.smem [#allocation9], 2
          %200 = sst [smem:[%s199]] 4
          %s201 = scalar_lea.smem [#allocation9], 3
          %202 = sst [smem:[%s201]] 64
          %s203 = scalar_lea.smem [#allocation9], 4
          %204 = sst [smem:[%s203]] 64
          %s205 = scalar_lea.smem [#allocation9], 5
          %206 = sst [smem:[%s205]] 4
          %208 = dma.general %s176, 1024, %s190, %s165, 131072, [#allocation9], %s188, 0
        $region28: #{tpu_custom_call.1} parent=23 // pred_fallthru
          _
      $region24: #{tpu_custom_call.1} parent=5 // pred_fallthru
        _
      %p209 = scmp.le.s32.totalorder 1, %s16
      %p210 = scmp.lt.s32.totalorder %s16, 9
      %p211 = pnand %p209, %p210
      %p212 = pneg %p211
      // Predicated region
      $region29: #{tpu_custom_call.1} parent=5 // pred_check
        _
      $region30: #{tpu_custom_call.1} parent=5 // pred_check_branch
        %214 = sbr.rel (%p211) target = $region32
      $region31: #{tpu_custom_call.1} parent=5 // pred_region
        %s215 = ssub.s32 %s16, 1
        %s216 = sand.u32 %s43, 1
        %s217 = scalar_lea.sflag [#allocation3], %s216
        %s218 = sand.u32 %s43, 1
        %s219 = smul.addr %s218, 64
        %s220 = scalar_lea.vmem [#allocation2], %s219
        // Predicated region
        $region33: #{tpu_custom_call.1} parent=31 // pred_check
          %p221 = pneg %p56
        $region34: #{tpu_custom_call.1} parent=31 // pred_check_branch
          %223 = sbr.rel (%p221) target = $region36
        $region35: #{tpu_custom_call.1} parent=31 // pred_region
          %224 = dma.done %s217, 1024
        $region36: #{tpu_custom_call.1} parent=31 // pred_fallthru
          _
        // Predicated region
        $region37: #{tpu_custom_call.1} parent=31 // pred_check
          %p225 = pneg %p77
        $region38: #{tpu_custom_call.1} parent=31 // pred_check_branch
          %227 = sbr.rel (%p225) target = $region40
        $region39: #{tpu_custom_call.1} parent=31 // pred_region
          %228 = dma.done [#allocation6], 1024
        $region40: #{tpu_custom_call.1} parent=31 // pred_fallthru
          _
        %s229 = sand.u32 %s43, 1
        %s230 = scalar_lea.sflag [#allocation3], %s229
        %s231 = sand.u32 %s43, 1
        %s232 = smul.addr %s231, 64
        %s233 = scalar_lea.vmem [#allocation2], %s232
        %p234 = pneg %p56
        %p235 = pneg %p53
        %p236 = pneg %p77
        %p237 = pneg %p74
        %p238 = pneg %p98
        %p239 = pneg %p95
        %p240 = pneg %p126
        %p241 = pneg %p123
        %s242 = sand.u32 %s113, 1
        %s243 = scalar_lea.sflag [#allocation4], %s242
        %s244 = sand.u32 %s113, 1
        %s245 = smul.addr %s244, 4
        %s246 = scalar_lea.vmem [#allocation7], %s245
        %v247 = vld [vmem:[%s2] sm:$0x1]
        %v249 = vlaneseq
        %v250 = vshrl.u32 %v249, 7
        %v251 = vsub.s32 0, %v250
        %v252 = vrot.slane %v247, %v251
        %v254 = vld [vmem:[%s220] sm:$0xf]
        %v255 = vld [vmem:[#allocation5] sm:$0xf]
        %vm256 = vcmask 31744
        %v258 = vsel %vm256, %v254, 0
        %vm260 = vcmask 1043456
        %v262 = vsel %vm260, %v255, 0
        %264 = vmatprep.subr.mxu0 0.0
        %265 = vmatpush1.msra.mxu0 0.0
        %266 = vmatprep.subr.mxu0 0.0
        %267 = vmatpush1.msra.mxu0 0.0
        %268 = vmatprep.subr.mxu0 0.0
        %269 = vmatpush1.msra.mxu0 0.0
        %270 = vmatprep.subr.mxu0 0.0
        %271 = vmatpush1.msra.mxu0 0.0
        %272 = vmatprep.subr.mxu0 0.0
        %273 = vmatpush1.msra.mxu0 0.0
        %274 = vmatprep.subr.mxu0 0.0
        %275 = vmatpush1.msra.mxu0 0.0
        %276 = vmatprep.subr.mxu0 0.0
        %277 = vmatpush1.msra.mxu0 0.0
        %278 = vmatprep.subr.mxu0 0.0
        %279 = vmatpush1.msra.mxu0 0.0
        %280 = vmatprep.subr.mxu0 0.0
        %281 = vmatpush1.msra.mxu0 0.0
        %282 = vmatprep.subr.mxu0 0.0
        %283 = vmatpush1.msra.mxu0 0.0
        %284 = vmatprep.subr.mxu0 0.0
        %285 = vmatpush1.msra.mxu0 0.0
        %286 = vmatprep.subr.mxu0 0.0
        %287 = vmatpush1.msra.mxu0 0.0
        %288 = vmatprep.subr.mxu0 0.0
        %289 = vmatpush1.msra.mxu0 0.0
        %290 = vmatprep.subr.mxu0 0.0
        %291 = vmatpush1.msra.mxu0 0.0
        %292 = vmatprep.subr.mxu0 0.0
        %293 = vmatpush1.msra.mxu0 0.0
        %294 = vmatprep.subr.mxu0 0.0
        %295 = vmatpush1.msra.mxu0 %v262
        %296 = vmatprep.subr.mxu0 0.0
        %297 = vmatpush2.msra.mxu0 0.0
        %298 = vmatprep.subr.mxu0 0.0
        %299 = vmatpush2.msra.mxu0 0.0
        %300 = vmatprep.subr.mxu0 0.0
        %301 = vmatpush2.msra.mxu0 0.0
        %302 = vmatprep.subr.mxu0 0.0
        %303 = vmatpush2.msra.mxu0 0.0
        %304 = vmatprep.subr.mxu0 0.0
        %305 = vmatpush2.msra.mxu0 0.0
        %306 = vmatprep.subr.mxu0 0.0
        %307 = vmatpush2.msra.mxu0 0.0
        %308 = vmatprep.subr.mxu0 0.0
        %309 = vmatpush2.msra.mxu0 0.0
        %310 = vmatprep.subr.mxu0 0.0
        %311 = vmatpush2.msra.mxu0 0.0
        %312 = vmatprep.subr.mxu0 0.0
        %313 = vmatpush2.msra.mxu0 0.0
        %314 = vmatprep.subr.mxu0 0.0
        %315 = vmatpush2.msra.mxu0 0.0
        %316 = vmatprep.subr.mxu0 0.0
        %317 = vmatpush2.msra.mxu0 0.0
        %318 = vmatprep.subr.mxu0 0.0
        %319 = vmatpush2.msra.mxu0 0.0
        %320 = vmatprep.subr.mxu0 0.0
        %321 = vmatpush2.msra.mxu0 0.0
        %322 = vmatprep.subr.mxu0 0.0
        %323 = vmatpush2.msra.mxu0 0.0
        %324 = vmatprep.subr.mxu0 0.0
        %325 = vmatpush2.msra.mxu0 0.0
        %326 = vmatprep.subr.mxu0 0.0
        %327 = vmatpush2.msra.mxu0 0.0
        %328 = vmatprep.mubr.f32.mxu0 0.0
        %329 = vmatmul.mubr.f32.gmra.mxu0 %v258
        %v330 = vpop.f32.mrf.mxu0
        %v331 = vadd.f32 0.0, %v330
        %v332 = vpop.f32.mrf.mxu0
        %333 = vdwg.mxu0
        %v334 = vadd.f32 %v252, %v331
        %s335 = scalar_lea.vmem %s220, 4 [#allocation2]
        %v336 = vld [vmem:[%s335] sm:$0xf]
        %s337 = scalar_lea.vmem [#allocation5], 4
        %v338 = vld [vmem:[%s337] sm:$0xf]
        %v340 = vsel %vm256, %v336, 0
        %v343 = vsel %vm260, %v338, 0
        %345 = vmatprep.subr.mxu0 0.0
        %346 = vmatpush1.msra.mxu0 0.0
        %347 = vmatprep.subr.mxu0 0.0
        %348 = vmatpush1.msra.mxu0 0.0
        %349 = vmatprep.subr.mxu0 0.0
        %350 = vmatpush1.msra.mxu0 0.0
        %351 = vmatprep.subr.mxu0 0.0
        %352 = vmatpush1.msra.mxu0 0.0
        %353 = vmatprep.subr.mxu0 0.0
        %354 = vmatpush1.msra.mxu0 0.0
        %355 = vmatprep.subr.mxu0 0.0
        %356 = vmatpush1.msra.mxu0 0.0
        %357 = vmatprep.subr.mxu0 0.0
        %358 = vmatpush1.msra.mxu0 0.0
        %359 = vmatprep.subr.mxu0 0.0
        %360 = vmatpush1.msra.mxu0 0.0
        %361 = vmatprep.subr.mxu0 0.0
        %362 = vmatpush1.msra.mxu0 0.0
        %363 = vmatprep.subr.mxu0 0.0
        %364 = vmatpush1.msra.mxu0 0.0
        %365 = vmatprep.subr.mxu0 0.0
        %366 = vmatpush1.msra.mxu0 0.0
        %367 = vmatprep.subr.mxu0 0.0
        %368 = vmatpush1.msra.mxu0 0.0
        %369 = vmatprep.subr.mxu0 0.0
        %370 = vmatpush1.msra.mxu0 0.0
        %371 = vmatprep.subr.mxu0 0.0
        %372 = vmatpush1.msra.mxu0 0.0
        %373 = vmatprep.subr.mxu0 0.0
        %374 = vmatpush1.msra.mxu0 0.0
        %375 = vmatprep.subr.mxu0 0.0
        %376 = vmatpush1.msra.mxu0 %v343
        %377 = vmatprep.subr.mxu0 0.0
        %378 = vmatpush2.msra.mxu0 0.0
        %379 = vmatprep.subr.mxu0 0.0
        %380 = vmatpush2.msra.mxu0 0.0
        %381 = vmatprep.subr.mxu0 0.0
        %382 = vmatpush2.msra.mxu0 0.0
        %383 = vmatprep.subr.mxu0 0.0
        %384 = vmatpush2.msra.mxu0 0.0
        %385 = vmatprep.subr.mxu0 0.0
        %386 = vmatpush2.msra.mxu0 0.0
        %387 = vmatprep.subr.mxu0 0.0
        %388 = vmatpush2.msra.mxu0 0.0
        %389 = vmatprep.subr.mxu0 0.0
        %390 = vmatpush2.msra.mxu0 0.0
        %391 = vmatprep.subr.mxu0 0.0
        %392 = vmatpush2.msra.mxu0 0.0
        %393 = vmatprep.subr.mxu0 0.0
        %394 = vmatpush2.msra.mxu0 0.0
        %395 = vmatprep.subr.mxu0 0.0
        %396 = vmatpush2.msra.mxu0 0.0
        %397 = vmatprep.subr.mxu0 0.0
        %398 = vmatpush2.msra.mxu0 0.0
        %399 = vmatprep.subr.mxu0 0.0
        %400 = vmatpush2.msra.mxu0 0.0
        %401 = vmatprep.subr.mxu0 0.0
        %402 = vmatpush2.msra.mxu0 0.0
        %403 = vmatprep.subr.mxu0 0.0
        %404 = vmatpush2.msra.mxu0 0.0
        %405 = vmatprep.subr.mxu0 0.0
        %406 = vmatpush2.msra.mxu0 0.0
        %407 = vmatprep.subr.mxu0 0.0
        %408 = vmatpush2.msra.mxu0 0.0
        %409 = vmatprep.mubr.f32.mxu0 0.0
        %410 = vmatmul.mubr.f32.gmra.mxu0 %v340
        %v411 = vpop.f32.mrf.mxu0
        %v412 = vadd.f32 0.0, %v411
        %v413 = vpop.f32.mrf.mxu0
        %414 = vdwg.mxu0
        %v415 = vadd.f32 %v334, %v412
        %s416 = scalar_lea.vmem %s220, 8 [#allocation2]
        %v417 = vld [vmem:[%s416] sm:$0xf]
        %s418 = scalar_lea.vmem [#allocation5], 8
        %v419 = vld [vmem:[%s418] sm:$0xf]
        %v421 = vsel %vm256, %v417, 0
        %v424 = vsel %vm260, %v419, 0
        %426 = vmatprep.subr.mxu0 0.0
        %427 = vmatpush1.msra.mxu0 0.0
        %428 = vmatprep.subr.mxu0 0.0
        %429 = vmatpush1.msra.mxu0 0.0
        %430 = vmatprep.subr.mxu0 0.0
        %431 = vmatpush1.msra.mxu0 0.0
        %432 = vmatprep.subr.mxu0 0.0
        %433 = vmatpush1.msra.mxu0 0.0
        %434 = vmatprep.subr.mxu0 0.0
        %435 = vmatpush1.msra.mxu0 0.0
        %436 = vmatprep.subr.mxu0 0.0
        %437 = vmatpush1.msra.mxu0 0.0
        %438 = vmatprep.subr.mxu0 0.0
        %439 = vmatpush1.msra.mxu0 0.0
        %440 = vmatprep.subr.mxu0 0.0
        %441 = vmatpush1.msra.mxu0 0.0
        %442 = vmatprep.subr.mxu0 0.0
        %443 = vmatpush1.msra.mxu0 0.0
        %444 = vmatprep.subr.mxu0 0.0
        %445 = vmatpush1.msra.mxu0 0.0
        %446 = vmatprep.subr.mxu0 0.0
        %447 = vmatpush1.msra.mxu0 0.0
        %448 = vmatprep.subr.mxu0 0.0
        %449 = vmatpush1.msra.mxu0 0.0
        %450 = vmatprep.subr.mxu0 0.0
        %451 = vmatpush1.msra.mxu0 0.0
        %452 = vmatprep.subr.mxu0 0.0
        %453 = vmatpush1.msra.mxu0 0.0
        %454 = vmatprep.subr.mxu0 0.0
        %455 = vmatpush1.msra.mxu0 0.0
        %456 = vmatprep.subr.mxu0 0.0
        %457 = vmatpush1.msra.mxu0 %v424
        %458 = vmatprep.subr.mxu0 0.0
        %459 = vmatpush2.msra.mxu0 0.0
        %460 = vmatprep.subr.mxu0 0.0
        %461 = vmatpush2.msra.mxu0 0.0
        %462 = vmatprep.subr.mxu0 0.0
        %463 = vmatpush2.msra.mxu0 0.0
        %464 = vmatprep.subr.mxu0 0.0
        %465 = vmatpush2.msra.mxu0 0.0
        %466 = vmatprep.subr.mxu0 0.0
        %467 = vmatpush2.msra.mxu0 0.0
        %468 = vmatprep.subr.mxu0 0.0
        %469 = vmatpush2.msra.mxu0 0.0
        %470 = vmatprep.subr.mxu0 0.0
        %471 = vmatpush2.msra.mxu0 0.0
        %472 = vmatprep.subr.mxu0 0.0
        %473 = vmatpush2.msra.mxu0 0.0
        %474 = vmatprep.subr.mxu0 0.0
        %475 = vmatpush2.msra.mxu0 0.0
        %476 = vmatprep.subr.mxu0 0.0
        %477 = vmatpush2.msra.mxu0 0.0
        %478 = vmatprep.subr.mxu0 0.0
        %479 = vmatpush2.msra.mxu0 0.0
        %480 = vmatprep.subr.mxu0 0.0
        %481 = vmatpush2.msra.mxu0 0.0
        %482 = vmatprep.subr.mxu0 0.0
        %483 = vmatpush2.msra.mxu0 0.0
        %484 = vmatprep.subr.mxu0 0.0
        %485 = vmatpush2.msra.mxu0 0.0
        %486 = vmatprep.subr.mxu0 0.0
        %487 = vmatpush2.msra.mxu0 0.0
        %488 = vmatprep.subr.mxu0 0.0
        %489 = vmatpush2.msra.mxu0 0.0
        %490 = vmatprep.mubr.f32.mxu0 0.0
        %491 = vmatmul.mubr.f32.gmra.mxu0 %v421
        %v492 = vpop.f32.mrf.mxu0
        %v493 = vadd.f32 0.0, %v492
        %v494 = vpop.f32.mrf.mxu0
        %495 = vdwg.mxu0
        %v496 = vadd.f32 %v415, %v493
        %s497 = scalar_lea.vmem %s220, 12 [#allocation2]
        %v498 = vld [vmem:[%s497] sm:$0xf]
        %s499 = scalar_lea.vmem [#allocation5], 12
        %v500 = vld [vmem:[%s499] sm:$0xf]
        %v502 = vsel %vm256, %v498, 0
        %v505 = vsel %vm260, %v500, 0
        %507 = vmatprep.subr.mxu0 0.0
        %508 = vmatpush1.msra.mxu0 0.0
        %509 = vmatprep.subr.mxu0 0.0
        %510 = vmatpush1.msra.mxu0 0.0
        %511 = vmatprep.subr.mxu0 0.0
        %512 = vmatpush1.msra.mxu0 0.0
        %513 = vmatprep.subr.mxu0 0.0
        %514 = vmatpush1.msra.mxu0 0.0
        %515 = vmatprep.subr.mxu0 0.0
        %516 = vmatpush1.msra.mxu0 0.0
        %517 = vmatprep.subr.mxu0 0.0
        %518 = vmatpush1.msra.mxu0 0.0
        %519 = vmatprep.subr.mxu0 0.0
        %520 = vmatpush1.msra.mxu0 0.0
        %521 = vmatprep.subr.mxu0 0.0
        %522 = vmatpush1.msra.mxu0 0.0
        %523 = vmatprep.subr.mxu0 0.0
        %524 = vmatpush1.msra.mxu0 0.0
        %525 = vmatprep.subr.mxu0 0.0
        %526 = vmatpush1.msra.mxu0 0.0
        %527 = vmatprep.subr.mxu0 0.0
        %528 = vmatpush1.msra.mxu0 0.0
        %529 = vmatprep.subr.mxu0 0.0
        %530 = vmatpush1.msra.mxu0 0.0
        %531 = vmatprep.subr.mxu0 0.0
        %532 = vmatpush1.msra.mxu0 0.0
        %533 = vmatprep.subr.mxu0 0.0
        %534 = vmatpush1.msra.mxu0 0.0
        %535 = vmatprep.subr.mxu0 0.0
        %536 = vmatpush1.msra.mxu0 0.0
        %537 = vmatprep.subr.mxu0 0.0
        %538 = vmatpush1.msra.mxu0 %v505
        %539 = vmatprep.subr.mxu0 0.0
        %540 = vmatpush2.msra.mxu0 0.0
        %541 = vmatprep.subr.mxu0 0.0
        %542 = vmatpush2.msra.mxu0 0.0
        %543 = vmatprep.subr.mxu0 0.0
        %544 = vmatpush2.msra.mxu0 0.0
        %545 = vmatprep.subr.mxu0 0.0
        %546 = vmatpush2.msra.mxu0 0.0
        %547 = vmatprep.subr.mxu0 0.0
        %548 = vmatpush2.msra.mxu0 0.0
        %549 = vmatprep.subr.mxu0 0.0
        %550 = vmatpush2.msra.mxu0 0.0
        %551 = vmatprep.subr.mxu0 0.0
        %552 = vmatpush2.msra.mxu0 0.0
        %553 = vmatprep.subr.mxu0 0.0
        %554 = vmatpush2.msra.mxu0 0.0
        %555 = vmatprep.subr.mxu0 0.0
        %556 = vmatpush2.msra.mxu0 0.0
        %557 = vmatprep.subr.mxu0 0.0
        %558 = vmatpush2.msra.mxu0 0.0
        %559 = vmatprep.subr.mxu0 0.0
        %560 = vmatpush2.msra.mxu0 0.0
        %561 = vmatprep.subr.mxu0 0.0
        %562 = vmatpush2.msra.mxu0 0.0
        %563 = vmatprep.subr.mxu0 0.0
        %564 = vmatpush2.msra.mxu0 0.0
        %565 = vmatprep.subr.mxu0 0.0
        %566 = vmatpush2.msra.mxu0 0.0
        %567 = vmatprep.subr.mxu0 0.0
        %568 = vmatpush2.msra.mxu0 0.0
        %569 = vmatprep.subr.mxu0 0.0
        %570 = vmatpush2.msra.mxu0 0.0
        %571 = vmatprep.mubr.f32.mxu0 0.0
        %572 = vmatmul.mubr.f32.gmra.mxu0 %v502
        %v573 = vpop.f32.mrf.mxu0
        %v574 = vadd.f32 0.0, %v573
        %v575 = vpop.f32.mrf.mxu0
        %576 = vdwg.mxu0
        %v577 = vadd.f32 %v496, %v574
        %s578 = scalar_lea.vmem %s220, 16 [#allocation2]
        %v579 = vld [vmem:[%s578] sm:$0xf]
        %s580 = scalar_lea.vmem [#allocation5], 16
        %v581 = vld [vmem:[%s580] sm:$0xf]
        %v583 = vsel %vm256, %v579, 0
        %v586 = vsel %vm260, %v581, 0
        %588 = vmatprep.subr.mxu0 0.0
        %589 = vmatpush1.msra.mxu0 0.0
        %590 = vmatprep.subr.mxu0 0.0
        %591 = vmatpush1.msra.mxu0 0.0
        %592 = vmatprep.subr.mxu0 0.0
        %593 = vmatpush1.msra.mxu0 0.0
        %594 = vmatprep.subr.mxu0 0.0
        %595 = vmatpush1.msra.mxu0 0.0
        %596 = vmatprep.subr.mxu0 0.0
        %597 = vmatpush1.msra.mxu0 0.0
        %598 = vmatprep.subr.mxu0 0.0
        %599 = vmatpush1.msra.mxu0 0.0
        %600 = vmatprep.subr.mxu0 0.0
        %601 = vmatpush1.msra.mxu0 0.0
        %602 = vmatprep.subr.mxu0 0.0
        %603 = vmatpush1.msra.mxu0 0.0
        %604 = vmatprep.subr.mxu0 0.0
        %605 = vmatpush1.msra.mxu0 0.0
        %606 = vmatprep.subr.mxu0 0.0
        %607 = vmatpush1.msra.mxu0 0.0
        %608 = vmatprep.subr.mxu0 0.0
        %609 = vmatpush1.msra.mxu0 0.0
        %610 = vmatprep.subr.mxu0 0.0
        %611 = vmatpush1.msra.mxu0 0.0
        %612 = vmatprep.subr.mxu0 0.0
        %613 = vmatpush1.msra.mxu0 0.0
        %614 = vmatprep.subr.mxu0 0.0
        %615 = vmatpush1.msra.mxu0 0.0
        %616 = vmatprep.subr.mxu0 0.0
        %617 = vmatpush1.msra.mxu0 0.0
        %618 = vmatprep.subr.mxu0 0.0
        %619 = vmatpush1.msra.mxu0 %v586
        %620 = vmatprep.subr.mxu0 0.0
        %621 = vmatpush2.msra.mxu0 0.0
        %622 = vmatprep.subr.mxu0 0.0
        %623 = vmatpush2.msra.mxu0 0.0
        %624 = vmatprep.subr.mxu0 0.0
        %625 = vmatpush2.msra.mxu0 0.0
        %626 = vmatprep.subr.mxu0 0.0
        %627 = vmatpush2.msra.mxu0 0.0
        %628 = vmatprep.subr.mxu0 0.0
        %629 = vmatpush2.msra.mxu0 0.0
        %630 = vmatprep.subr.mxu0 0.0
        %631 = vmatpush2.msra.mxu0 0.0
        %632 = vmatprep.subr.mxu0 0.0
        %633 = vmatpush2.msra.mxu0 0.0
        %634 = vmatprep.subr.mxu0 0.0
        %635 = vmatpush2.msra.mxu0 0.0
        %636 = vmatprep.subr.mxu0 0.0
        %637 = vmatpush2.msra.mxu0 0.0
        %638 = vmatprep.subr.mxu0 0.0
        %639 = vmatpush2.msra.mxu0 0.0
        %640 = vmatprep.subr.mxu0 0.0
        %641 = vmatpush2.msra.mxu0 0.0
        %642 = vmatprep.subr.mxu0 0.0
        %643 = vmatpush2.msra.mxu0 0.0
        %644 = vmatprep.subr.mxu0 0.0
        %645 = vmatpush2.msra.mxu0 0.0
        %646 = vmatprep.subr.mxu0 0.0
        %647 = vmatpush2.msra.mxu0 0.0
        %648 = vmatprep.subr.mxu0 0.0
        %649 = vmatpush2.msra.mxu0 0.0
        %650 = vmatprep.subr.mxu0 0.0
        %651 = vmatpush2.msra.mxu0 0.0
        %652 = vmatprep.mubr.f32.mxu0 0.0
        %653 = vmatmul.mubr.f32.gmra.mxu0 %v583
        %v654 = vpop.f32.mrf.mxu0
        %v655 = vadd.f32 0.0, %v654
        %v656 = vpop.f32.mrf.mxu0
        %657 = vdwg.mxu0
        %v658 = vadd.f32 %v577, %v655
        %s659 = scalar_lea.vmem %s220, 20 [#allocation2]
        %v660 = vld [vmem:[%s659] sm:$0xf]
        %s661 = scalar_lea.vmem [#allocation5], 20
        %v662 = vld [vmem:[%s661] sm:$0xf]
        %v664 = vsel %vm256, %v660, 0
        %v667 = vsel %vm260, %v662, 0
        %669 = vmatprep.subr.mxu0 0.0
        %670 = vmatpush1.msra.mxu0 0.0
        %671 = vmatprep.subr.mxu0 0.0
        %672 = vmatpush1.msra.mxu0 0.0
        %673 = vmatprep.subr.mxu0 0.0
        %674 = vmatpush1.msra.mxu0 0.0
        %675 = vmatprep.subr.mxu0 0.0
        %676 = vmatpush1.msra.mxu0 0.0
        %677 = vmatprep.subr.mxu0 0.0
        %678 = vmatpush1.msra.mxu0 0.0
        %679 = vmatprep.subr.mxu0 0.0
        %680 = vmatpush1.msra.mxu0 0.0
        %681 = vmatprep.subr.mxu0 0.0
        %682 = vmatpush1.msra.mxu0 0.0
        %683 = vmatprep.subr.mxu0 0.0
        %684 = vmatpush1.msra.mxu0 0.0
        %685 = vmatprep.subr.mxu0 0.0
        %686 = vmatpush1.msra.mxu0 0.0
        %687 = vmatprep.subr.mxu0 0.0
        %688 = vmatpush1.msra.mxu0 0.0
        %689 = vmatprep.subr.mxu0 0.0
        %690 = vmatpush1.msra.mxu0 0.0
        %691 = vmatprep.subr.mxu0 0.0
        %692 = vmatpush1.msra.mxu0 0.0
        %693 = vmatprep.subr.mxu0 0.0
        %694 = vmatpush1.msra.mxu0 0.0
        %695 = vmatprep.subr.mxu0 0.0
        %696 = vmatpush1.msra.mxu0 0.0
        %697 = vmatprep.subr.mxu0 0.0
        %698 = vmatpush1.msra.mxu0 0.0
        %699 = vmatprep.subr.mxu0 0.0
        %700 = vmatpush1.msra.mxu0 %v667
        %701 = vmatprep.subr.mxu0 0.0
        %702 = vmatpush2.msra.mxu0 0.0
        %703 = vmatprep.subr.mxu0 0.0
        %704 = vmatpush2.msra.mxu0 0.0
        %705 = vmatprep.subr.mxu0 0.0
        %706 = vmatpush2.msra.mxu0 0.0
        %707 = vmatprep.subr.mxu0 0.0
        %708 = vmatpush2.msra.mxu0 0.0
        %709 = vmatprep.subr.mxu0 0.0
        %710 = vmatpush2.msra.mxu0 0.0
        %711 = vmatprep.subr.mxu0 0.0
        %712 = vmatpush2.msra.mxu0 0.0
        %713 = vmatprep.subr.mxu0 0.0
        %714 = vmatpush2.msra.mxu0 0.0
        %715 = vmatprep.subr.mxu0 0.0
        %716 = vmatpush2.msra.mxu0 0.0
        %717 = vmatprep.subr.mxu0 0.0
        %718 = vmatpush2.msra.mxu0 0.0
        %719 = vmatprep.subr.mxu0 0.0
        %720 = vmatpush2.msra.mxu0 0.0
        %721 = vmatprep.subr.mxu0 0.0
        %722 = vmatpush2.msra.mxu0 0.0
        %723 = vmatprep.subr.mxu0 0.0
        %724 = vmatpush2.msra.mxu0 0.0
        %725 = vmatprep.subr.mxu0 0.0
        %726 = vmatpush2.msra.mxu0 0.0
        %727 = vmatprep.subr.mxu0 0.0
        %728 = vmatpush2.msra.mxu0 0.0
        %729 = vmatprep.subr.mxu0 0.0
        %730 = vmatpush2.msra.mxu0 0.0
        %731 = vmatprep.subr.mxu0 0.0
        %732 = vmatpush2.msra.mxu0 0.0
        %733 = vmatprep.mubr.f32.mxu0 0.0
        %734 = vmatmul.mubr.f32.gmra.mxu0 %v664
        %v735 = vpop.f32.mrf.mxu0
        %v736 = vadd.f32 0.0, %v735
        %v737 = vpop.f32.mrf.mxu0
        %738 = vdwg.mxu0
        %v739 = vadd.f32 %v658, %v736
        %s740 = scalar_lea.vmem %s220, 24 [#allocation2]
        %v741 = vld [vmem:[%s740] sm:$0xf]
        %s742 = scalar_lea.vmem [#allocation5], 24
        %v743 = vld [vmem:[%s742] sm:$0xf]
        %v745 = vsel %vm256, %v741, 0
        %v748 = vsel %vm260, %v743, 0
        %750 = vmatprep.subr.mxu0 0.0
        %751 = vmatpush1.msra.mxu0 0.0
        %752 = vmatprep.subr.mxu0 0.0
        %753 = vmatpush1.msra.mxu0 0.0
        %754 = vmatprep.subr.mxu0 0.0
        %755 = vmatpush1.msra.mxu0 0.0
        %756 = vmatprep.subr.mxu0 0.0
        %757 = vmatpush1.msra.mxu0 0.0
        %758 = vmatprep.subr.mxu0 0.0
        %759 = vmatpush1.msra.mxu0 0.0
        %760 = vmatprep.subr.mxu0 0.0
        %761 = vmatpush1.msra.mxu0 0.0
        %762 = vmatprep.subr.mxu0 0.0
        %763 = vmatpush1.msra.mxu0 0.0
        %764 = vmatprep.subr.mxu0 0.0
        %765 = vmatpush1.msra.mxu0 0.0
        %766 = vmatprep.subr.mxu0 0.0
        %767 = vmatpush1.msra.mxu0 0.0
        %768 = vmatprep.subr.mxu0 0.0
        %769 = vmatpush1.msra.mxu0 0.0
        %770 = vmatprep.subr.mxu0 0.0
        %771 = vmatpush1.msra.mxu0 0.0
        %772 = vmatprep.subr.mxu0 0.0
        %773 = vmatpush1.msra.mxu0 0.0
        %774 = vmatprep.subr.mxu0 0.0
        %775 = vmatpush1.msra.mxu0 0.0
        %776 = vmatprep.subr.mxu0 0.0
        %777 = vmatpush1.msra.mxu0 0.0
        %778 = vmatprep.subr.mxu0 0.0
        %779 = vmatpush1.msra.mxu0 0.0
        %780 = vmatprep.subr.mxu0 0.0
        %781 = vmatpush1.msra.mxu0 %v748
        %782 = vmatprep.subr.mxu0 0.0
        %783 = vmatpush2.msra.mxu0 0.0
        %784 = vmatprep.subr.mxu0 0.0
        %785 = vmatpush2.msra.mxu0 0.0
        %786 = vmatprep.subr.mxu0 0.0
        %787 = vmatpush2.msra.mxu0 0.0
        %788 = vmatprep.subr.mxu0 0.0
        %789 = vmatpush2.msra.mxu0 0.0
        %790 = vmatprep.subr.mxu0 0.0
        %791 = vmatpush2.msra.mxu0 0.0
        %792 = vmatprep.subr.mxu0 0.0
        %793 = vmatpush2.msra.mxu0 0.0
        %794 = vmatprep.subr.mxu0 0.0
        %795 = vmatpush2.msra.mxu0 0.0
        %796 = vmatprep.subr.mxu0 0.0
        %797 = vmatpush2.msra.mxu0 0.0
        %798 = vmatprep.subr.mxu0 0.0
        %799 = vmatpush2.msra.mxu0 0.0
        %800 = vmatprep.subr.mxu0 0.0
        %801 = vmatpush2.msra.mxu0 0.0
        %802 = vmatprep.subr.mxu0 0.0
        %803 = vmatpush2.msra.mxu0 0.0
        %804 = vmatprep.subr.mxu0 0.0
        %805 = vmatpush2.msra.mxu0 0.0
        %806 = vmatprep.subr.mxu0 0.0
        %807 = vmatpush2.msra.mxu0 0.0
        %808 = vmatprep.subr.mxu0 0.0
        %809 = vmatpush2.msra.mxu0 0.0
        %810 = vmatprep.subr.mxu0 0.0
        %811 = vmatpush2.msra.mxu0 0.0
        %812 = vmatprep.subr.mxu0 0.0
        %813 = vmatpush2.msra.mxu0 0.0
        %814 = vmatprep.mubr.f32.mxu0 0.0
        %815 = vmatmul.mubr.f32.gmra.mxu0 %v745
        %v816 = vpop.f32.mrf.mxu0
        %v817 = vadd.f32 0.0, %v816
        %v818 = vpop.f32.mrf.mxu0
        %819 = vdwg.mxu0
        %v820 = vadd.f32 %v739, %v817
        %s821 = scalar_lea.vmem %s220, 28 [#allocation2]
        %v822 = vld [vmem:[%s821] sm:$0xf]
        %s823 = scalar_lea.vmem [#allocation5], 28
        %v824 = vld [vmem:[%s823] sm:$0xf]
        %v826 = vsel %vm256, %v822, 0
        %v829 = vsel %vm260, %v824, 0
        %831 = vmatprep.subr.mxu0 0.0
        %832 = vmatpush1.msra.mxu0 0.0
        %833 = vmatprep.subr.mxu0 0.0
        %834 = vmatpush1.msra.mxu0 0.0
        %835 = vmatprep.subr.mxu0 0.0
        %836 = vmatpush1.msra.mxu0 0.0
        %837 = vmatprep.subr.mxu0 0.0
        %838 = vmatpush1.msra.mxu0 0.0
        %839 = vmatprep.subr.mxu0 0.0
        %840 = vmatpush1.msra.mxu0 0.0
        %841 = vmatprep.subr.mxu0 0.0
        %842 = vmatpush1.msra.mxu0 0.0
        %843 = vmatprep.subr.mxu0 0.0
        %844 = vmatpush1.msra.mxu0 0.0
        %845 = vmatprep.subr.mxu0 0.0
        %846 = vmatpush1.msra.mxu0 0.0
        %847 = vmatprep.subr.mxu0 0.0
        %848 = vmatpush1.msra.mxu0 0.0
        %849 = vmatprep.subr.mxu0 0.0
        %850 = vmatpush1.msra.mxu0 0.0
        %851 = vmatprep.subr.mxu0 0.0
        %852 = vmatpush1.msra.mxu0 0.0
        %853 = vmatprep.subr.mxu0 0.0
        %854 = vmatpush1.msra.mxu0 0.0
        %855 = vmatprep.subr.mxu0 0.0
        %856 = vmatpush1.msra.mxu0 0.0
        %857 = vmatprep.subr.mxu0 0.0
        %858 = vmatpush1.msra.mxu0 0.0
        %859 = vmatprep.subr.mxu0 0.0
        %860 = vmatpush1.msra.mxu0 0.0
        %861 = vmatprep.subr.mxu0 0.0
        %862 = vmatpush1.msra.mxu0 %v829
        %863 = vmatprep.subr.mxu0 0.0
        %864 = vmatpush2.msra.mxu0 0.0
        %865 = vmatprep.subr.mxu0 0.0
        %866 = vmatpush2.msra.mxu0 0.0
        %867 = vmatprep.subr.mxu0 0.0
        %868 = vmatpush2.msra.mxu0 0.0
        %869 = vmatprep.subr.mxu0 0.0
        %870 = vmatpush2.msra.mxu0 0.0
        %871 = vmatprep.subr.mxu0 0.0
        %872 = vmatpush2.msra.mxu0 0.0
        %873 = vmatprep.subr.mxu0 0.0
        %874 = vmatpush2.msra.mxu0 0.0
        %875 = vmatprep.subr.mxu0 0.0
        %876 = vmatpush2.msra.mxu0 0.0
        %877 = vmatprep.subr.mxu0 0.0
        %878 = vmatpush2.msra.mxu0 0.0
        %879 = vmatprep.subr.mxu0 0.0
        %880 = vmatpush2.msra.mxu0 0.0
        %881 = vmatprep.subr.mxu0 0.0
        %882 = vmatpush2.msra.mxu0 0.0
        %883 = vmatprep.subr.mxu0 0.0
        %884 = vmatpush2.msra.mxu0 0.0
        %885 = vmatprep.subr.mxu0 0.0
        %886 = vmatpush2.msra.mxu0 0.0
        %887 = vmatprep.subr.mxu0 0.0
        %888 = vmatpush2.msra.mxu0 0.0
        %889 = vmatprep.subr.mxu0 0.0
        %890 = vmatpush2.msra.mxu0 0.0
        %891 = vmatprep.subr.mxu0 0.0
        %892 = vmatpush2.msra.mxu0 0.0
        %893 = vmatprep.subr.mxu0 0.0
        %894 = vmatpush2.msra.mxu0 0.0
        %895 = vmatprep.mubr.f32.mxu0 0.0
        %896 = vmatmul.mubr.f32.gmra.mxu0 %v826
        %v897 = vpop.f32.mrf.mxu0
        %v898 = vadd.f32 0.0, %v897
        %v899 = vpop.f32.mrf.mxu0
        %900 = vdwg.mxu0
        %v901 = vadd.f32 %v820, %v898
        %s902 = scalar_lea.vmem %s220, 32 [#allocation2]
        %v903 = vld [vmem:[%s902] sm:$0xf]
        %s904 = scalar_lea.vmem [#allocation5], 32
        %v905 = vld [vmem:[%s904] sm:$0xf]
        %v907 = vsel %vm256, %v903, 0
        %v910 = vsel %vm260, %v905, 0
        %912 = vmatprep.subr.mxu0 0.0
        %913 = vmatpush1.msra.mxu0 0.0
        %914 = vmatprep.subr.mxu0 0.0
        %915 = vmatpush1.msra.mxu0 0.0
        %916 = vmatprep.subr.mxu0 0.0
        %917 = vmatpush1.msra.mxu0 0.0
        %918 = vmatprep.subr.mxu0 0.0
        %919 = vmatpush1.msra.mxu0 0.0
        %920 = vmatprep.subr.mxu0 0.0
        %921 = vmatpush1.msra.mxu0 0.0
        %922 = vmatprep.subr.mxu0 0.0
        %923 = vmatpush1.msra.mxu0 0.0
        %924 = vmatprep.subr.mxu0 0.0
        %925 = vmatpush1.msra.mxu0 0.0
        %926 = vmatprep.subr.mxu0 0.0
        %927 = vmatpush1.msra.mxu0 0.0
        %928 = vmatprep.subr.mxu0 0.0
        %929 = vmatpush1.msra.mxu0 0.0
        %930 = vmatprep.subr.mxu0 0.0
        %931 = vmatpush1.msra.mxu0 0.0
        %932 = vmatprep.subr.mxu0 0.0
        %933 = vmatpush1.msra.mxu0 0.0
        %934 = vmatprep.subr.mxu0 0.0
        %935 = vmatpush1.msra.mxu0 0.0
        %936 = vmatprep.subr.mxu0 0.0
        %937 = vmatpush1.msra.mxu0 0.0
        %938 = vmatprep.subr.mxu0 0.0
        %939 = vmatpush1.msra.mxu0 0.0
        %940 = vmatprep.subr.mxu0 0.0
        %941 = vmatpush1.msra.mxu0 0.0
        %942 = vmatprep.subr.mxu0 0.0
        %943 = vmatpush1.msra.mxu0 %v910
        %944 = vmatprep.subr.mxu0 0.0
        %945 = vmatpush2.msra.mxu0 0.0
        %946 = vmatprep.subr.mxu0 0.0
        %947 = vmatpush2.msra.mxu0 0.0
        %948 = vmatprep.subr.mxu0 0.0
        %949 = vmatpush2.msra.mxu0 0.0
        %950 = vmatprep.subr.mxu0 0.0
        %951 = vmatpush2.msra.mxu0 0.0
        %952 = vmatprep.subr.mxu0 0.0
        %953 = vmatpush2.msra.mxu0 0.0
        %954 = vmatprep.subr.mxu0 0.0
        %955 = vmatpush2.msra.mxu0 0.0
        %956 = vmatprep.subr.mxu0 0.0
        %957 = vmatpush2.msra.mxu0 0.0
        %958 = vmatprep.subr.mxu0 0.0
        %959 = vmatpush2.msra.mxu0 0.0
        %960 = vmatprep.subr.mxu0 0.0
        %961 = vmatpush2.msra.mxu0 0.0
        %962 = vmatprep.subr.mxu0 0.0
        %963 = vmatpush2.msra.mxu0 0.0
        %964 = vmatprep.subr.mxu0 0.0
        %965 = vmatpush2.msra.mxu0 0.0
        %966 = vmatprep.subr.mxu0 0.0
        %967 = vmatpush2.msra.mxu0 0.0
        %968 = vmatprep.subr.mxu0 0.0
        %969 = vmatpush2.msra.mxu0 0.0
        %970 = vmatprep.subr.mxu0 0.0
        %971 = vmatpush2.msra.mxu0 0.0
        %972 = vmatprep.subr.mxu0 0.0
        %973 = vmatpush2.msra.mxu0 0.0
        %974 = vmatprep.subr.mxu0 0.0
        %975 = vmatpush2.msra.mxu0 0.0
        %976 = vmatprep.mubr.f32.mxu0 0.0
        %977 = vmatmul.mubr.f32.gmra.mxu0 %v907
        %v978 = vpop.f32.mrf.mxu0
        %v979 = vadd.f32 0.0, %v978
        %v980 = vpop.f32.mrf.mxu0
        %981 = vdwg.mxu0
        %v982 = vadd.f32 %v901, %v979
        %s983 = scalar_lea.vmem %s220, 36 [#allocation2]
        %v984 = vld [vmem:[%s983] sm:$0xf]
        %s985 = scalar_lea.vmem [#allocation5], 36
        %v986 = vld [vmem:[%s985] sm:$0xf]
        %v988 = vsel %vm256, %v984, 0
        %v991 = vsel %vm260, %v986, 0
        %993 = vmatprep.subr.mxu0 0.0
        %994 = vmatpush1.msra.mxu0 0.0
        %995 = vmatprep.subr.mxu0 0.0
        %996 = vmatpush1.msra.mxu0 0.0
        %997 = vmatprep.subr.mxu0 0.0
        %998 = vmatpush1.msra.mxu0 0.0
        %999 = vmatprep.subr.mxu0 0.0
        %1000 = vmatpush1.msra.mxu0 0.0
        %1001 = vmatprep.subr.mxu0 0.0
        %1002 = vmatpush1.msra.mxu0 0.0
        %1003 = vmatprep.subr.mxu0 0.0
        %1004 = vmatpush1.msra.mxu0 0.0
        %1005 = vmatprep.subr.mxu0 0.0
        %1006 = vmatpush1.msra.mxu0 0.0
        %1007 = vmatprep.subr.mxu0 0.0
        %1008 = vmatpush1.msra.mxu0 0.0
        %1009 = vmatprep.subr.mxu0 0.0
        %1010 = vmatpush1.msra.mxu0 0.0
        %1011 = vmatprep.subr.mxu0 0.0
        %1012 = vmatpush1.msra.mxu0 0.0
        %1013 = vmatprep.subr.mxu0 0.0
        %1014 = vmatpush1.msra.mxu0 0.0
        %1015 = vmatprep.subr.mxu0 0.0
        %1016 = vmatpush1.msra.mxu0 0.0
        %1017 = vmatprep.subr.mxu0 0.0
        %1018 = vmatpush1.msra.mxu0 0.0
        %1019 = vmatprep.subr.mxu0 0.0
        %1020 = vmatpush1.msra.mxu0 0.0
        %1021 = vmatprep.subr.mxu0 0.0
        %1022 = vmatpush1.msra.mxu0 0.0
        %1023 = vmatprep.subr.mxu0 0.0
        %1024 = vmatpush1.msra.mxu0 %v991
        %1025 = vmatprep.subr.mxu0 0.0
        %1026 = vmatpush2.msra.mxu0 0.0
        %1027 = vmatprep.subr.mxu0 0.0
        %1028 = vmatpush2.msra.mxu0 0.0
        %1029 = vmatprep.subr.mxu0 0.0
        %1030 = vmatpush2.msra.mxu0 0.0
        %1031 = vmatprep.subr.mxu0 0.0
        %1032 = vmatpush2.msra.mxu0 0.0
        %1033 = vmatprep.subr.mxu0 0.0
        %1034 = vmatpush2.msra.mxu0 0.0
        %1035 = vmatprep.subr.mxu0 0.0
        %1036 = vmatpush2.msra.mxu0 0.0
        %1037 = vmatprep.subr.mxu0 0.0
        %1038 = vmatpush2.msra.mxu0 0.0
        %1039 = vmatprep.subr.mxu0 0.0
        %1040 = vmatpush2.msra.mxu0 0.0
        %1041 = vmatprep.subr.mxu0 0.0
        %1042 = vmatpush2.msra.mxu0 0.0
        %1043 = vmatprep.subr.mxu0 0.0
        %1044 = vmatpush2.msra.mxu0 0.0
        %1045 = vmatprep.subr.mxu0 0.0
        %1046 = vmatpush2.msra.mxu0 0.0
        %1047 = vmatprep.subr.mxu0 0.0
        %1048 = vmatpush2.msra.mxu0 0.0
        %1049 = vmatprep.subr.mxu0 0.0
        %1050 = vmatpush2.msra.mxu0 0.0
        %1051 = vmatprep.subr.mxu0 0.0
        %1052 = vmatpush2.msra.mxu0 0.0
        %1053 = vmatprep.subr.mxu0 0.0
        %1054 = vmatpush2.msra.mxu0 0.0
        %1055 = vmatprep.subr.mxu0 0.0
        %1056 = vmatpush2.msra.mxu0 0.0
        %1057 = vmatprep.mubr.f32.mxu0 0.0
        %1058 = vmatmul.mubr.f32.gmra.mxu0 %v988
        %v1059 = vpop.f32.mrf.mxu0
        %v1060 = vadd.f32 0.0, %v1059
        %v1061 = vpop.f32.mrf.mxu0
        %1062 = vdwg.mxu0
        %v1063 = vadd.f32 %v982, %v1060
        %s1064 = scalar_lea.vmem %s220, 40 [#allocation2]
        %v1065 = vld [vmem:[%s1064] sm:$0xf]
        %s1066 = scalar_lea.vmem [#allocation5], 40
        %v1067 = vld [vmem:[%s1066] sm:$0xf]
        %v1069 = vsel %vm256, %v1065, 0
        %v1072 = vsel %vm260, %v1067, 0
        %1074 = vmatprep.subr.mxu0 0.0
        %1075 = vmatpush1.msra.mxu0 0.0
        %1076 = vmatprep.subr.mxu0 0.0
        %1077 = vmatpush1.msra.mxu0 0.0
        %1078 = vmatprep.subr.mxu0 0.0
        %1079 = vmatpush1.msra.mxu0 0.0
        %1080 = vmatprep.subr.mxu0 0.0
        %1081 = vmatpush1.msra.mxu0 0.0
        %1082 = vmatprep.subr.mxu0 0.0
        %1083 = vmatpush1.msra.mxu0 0.0
        %1084 = vmatprep.subr.mxu0 0.0
        %1085 = vmatpush1.msra.mxu0 0.0
        %1086 = vmatprep.subr.mxu0 0.0
        %1087 = vmatpush1.msra.mxu0 0.0
        %1088 = vmatprep.subr.mxu0 0.0
        %1089 = vmatpush1.msra.mxu0 0.0
        %1090 = vmatprep.subr.mxu0 0.0
        %1091 = vmatpush1.msra.mxu0 0.0
        %1092 = vmatprep.subr.mxu0 0.0
        %1093 = vmatpush1.msra.mxu0 0.0
        %1094 = vmatprep.subr.mxu0 0.0
        %1095 = vmatpush1.msra.mxu0 0.0
        %1096 = vmatprep.subr.mxu0 0.0
        %1097 = vmatpush1.msra.mxu0 0.0
        %1098 = vmatprep.subr.mxu0 0.0
        %1099 = vmatpush1.msra.mxu0 0.0
        %1100 = vmatprep.subr.mxu0 0.0
        %1101 = vmatpush1.msra.mxu0 0.0
        %1102 = vmatprep.subr.mxu0 0.0
        %1103 = vmatpush1.msra.mxu0 0.0
        %1104 = vmatprep.subr.mxu0 0.0
        %1105 = vmatpush1.msra.mxu0 %v1072
        %1106 = vmatprep.subr.mxu0 0.0
        %1107 = vmatpush2.msra.mxu0 0.0
        %1108 = vmatprep.subr.mxu0 0.0
        %1109 = vmatpush2.msra.mxu0 0.0
        %1110 = vmatprep.subr.mxu0 0.0
        %1111 = vmatpush2.msra.mxu0 0.0
        %1112 = vmatprep.subr.mxu0 0.0
        %1113 = vmatpush2.msra.mxu0 0.0
        %1114 = vmatprep.subr.mxu0 0.0
        %1115 = vmatpush2.msra.mxu0 0.0
        %1116 = vmatprep.subr.mxu0 0.0
        %1117 = vmatpush2.msra.mxu0 0.0
        %1118 = vmatprep.subr.mxu0 0.0
        %1119 = vmatpush2.msra.mxu0 0.0
        %1120 = vmatprep.subr.mxu0 0.0
        %1121 = vmatpush2.msra.mxu0 0.0
        %1122 = vmatprep.subr.mxu0 0.0
        %1123 = vmatpush2.msra.mxu0 0.0
        %1124 = vmatprep.subr.mxu0 0.0
        %1125 = vmatpush2.msra.mxu0 0.0
        %1126 = vmatprep.subr.mxu0 0.0
        %1127 = vmatpush2.msra.mxu0 0.0
        %1128 = vmatprep.subr.mxu0 0.0
        %1129 = vmatpush2.msra.mxu0 0.0
        %1130 = vmatprep.subr.mxu0 0.0
        %1131 = vmatpush2.msra.mxu0 0.0
        %1132 = vmatprep.subr.mxu0 0.0
        %1133 = vmatpush2.msra.mxu0 0.0
        %1134 = vmatprep.subr.mxu0 0.0
        %1135 = vmatpush2.msra.mxu0 0.0
        %1136 = vmatprep.subr.mxu0 0.0
        %1137 = vmatpush2.msra.mxu0 0.0
        %1138 = vmatprep.mubr.f32.mxu0 0.0
        %1139 = vmatmul.mubr.f32.gmra.mxu0 %v1069
        %v1140 = vpop.f32.mrf.mxu0
        %v1141 = vadd.f32 0.0, %v1140
        %v1142 = vpop.f32.mrf.mxu0
        %1143 = vdwg.mxu0
        %v1144 = vadd.f32 %v1063, %v1141
        %s1145 = scalar_lea.vmem %s220, 44 [#allocation2]
        %v1146 = vld [vmem:[%s1145] sm:$0xf]
        %s1147 = scalar_lea.vmem [#allocation5], 44
        %v1148 = vld [vmem:[%s1147] sm:$0xf]
        %v1150 = vsel %vm256, %v1146, 0
        %v1153 = vsel %vm260, %v1148, 0
        %1155 = vmatprep.subr.mxu0 0.0
        %1156 = vmatpush1.msra.mxu0 0.0
        %1157 = vmatprep.subr.mxu0 0.0
        %1158 = vmatpush1.msra.mxu0 0.0
        %1159 = vmatprep.subr.mxu0 0.0
        %1160 = vmatpush1.msra.mxu0 0.0
        %1161 = vmatprep.subr.mxu0 0.0
        %1162 = vmatpush1.msra.mxu0 0.0
        %1163 = vmatprep.subr.mxu0 0.0
        %1164 = vmatpush1.msra.mxu0 0.0
        %1165 = vmatprep.subr.mxu0 0.0
        %1166 = vmatpush1.msra.mxu0 0.0
        %1167 = vmatprep.subr.mxu0 0.0
        %1168 = vmatpush1.msra.mxu0 0.0
        %1169 = vmatprep.subr.mxu0 0.0
        %1170 = vmatpush1.msra.mxu0 0.0
        %1171 = vmatprep.subr.mxu0 0.0
        %1172 = vmatpush1.msra.mxu0 0.0
        %1173 = vmatprep.subr.mxu0 0.0
        %1174 = vmatpush1.msra.mxu0 0.0
        %1175 = vmatprep.subr.mxu0 0.0
        %1176 = vmatpush1.msra.mxu0 0.0
        %1177 = vmatprep.subr.mxu0 0.0
        %1178 = vmatpush1.msra.mxu0 0.0
        %1179 = vmatprep.subr.mxu0 0.0
        %1180 = vmatpush1.msra.mxu0 0.0
        %1181 = vmatprep.subr.mxu0 0.0
        %1182 = vmatpush1.msra.mxu0 0.0
        %1183 = vmatprep.subr.mxu0 0.0
        %1184 = vmatpush1.msra.mxu0 0.0
        %1185 = vmatprep.subr.mxu0 0.0
        %1186 = vmatpush1.msra.mxu0 %v1153
        %1187 = vmatprep.subr.mxu0 0.0
        %1188 = vmatpush2.msra.mxu0 0.0
        %1189 = vmatprep.subr.mxu0 0.0
        %1190 = vmatpush2.msra.mxu0 0.0
        %1191 = vmatprep.subr.mxu0 0.0
        %1192 = vmatpush2.msra.mxu0 0.0
        %1193 = vmatprep.subr.mxu0 0.0
        %1194 = vmatpush2.msra.mxu0 0.0
        %1195 = vmatprep.subr.mxu0 0.0
        %1196 = vmatpush2.msra.mxu0 0.0
        %1197 = vmatprep.subr.mxu0 0.0
        %1198 = vmatpush2.msra.mxu0 0.0
        %1199 = vmatprep.subr.mxu0 0.0
        %1200 = vmatpush2.msra.mxu0 0.0
        %1201 = vmatprep.subr.mxu0 0.0
        %1202 = vmatpush2.msra.mxu0 0.0
        %1203 = vmatprep.subr.mxu0 0.0
        %1204 = vmatpush2.msra.mxu0 0.0
        %1205 = vmatprep.subr.mxu0 0.0
        %1206 = vmatpush2.msra.mxu0 0.0
        %1207 = vmatprep.subr.mxu0 0.0
        %1208 = vmatpush2.msra.mxu0 0.0
        %1209 = vmatprep.subr.mxu0 0.0
        %1210 = vmatpush2.msra.mxu0 0.0
        %1211 = vmatprep.subr.mxu0 0.0
        %1212 = vmatpush2.msra.mxu0 0.0
        %1213 = vmatprep.subr.mxu0 0.0
        %1214 = vmatpush2.msra.mxu0 0.0
        %1215 = vmatprep.subr.mxu0 0.0
        %1216 = vmatpush2.msra.mxu0 0.0
        %1217 = vmatprep.subr.mxu0 0.0
        %1218 = vmatpush2.msra.mxu0 0.0
        %1219 = vmatprep.mubr.f32.mxu0 0.0
        %1220 = vmatmul.mubr.f32.gmra.mxu0 %v1150
        %v1221 = vpop.f32.mrf.mxu0
        %v1222 = vadd.f32 0.0, %v1221
        %v1223 = vpop.f32.mrf.mxu0
        %1224 = vdwg.mxu0
        %v1225 = vadd.f32 %v1144, %v1222
        %s1226 = scalar_lea.vmem %s220, 48 [#allocation2]
        %v1227 = vld [vmem:[%s1226] sm:$0xf]
        %s1228 = scalar_lea.vmem [#allocation5], 48
        %v1229 = vld [vmem:[%s1228] sm:$0xf]
        %v1231 = vsel %vm256, %v1227, 0
        %v1234 = vsel %vm260, %v1229, 0
        %1236 = vmatprep.subr.mxu0 0.0
        %1237 = vmatpush1.msra.mxu0 0.0
        %1238 = vmatprep.subr.mxu0 0.0
        %1239 = vmatpush1.msra.mxu0 0.0
        %1240 = vmatprep.subr.mxu0 0.0
        %1241 = vmatpush1.msra.mxu0 0.0
        %1242 = vmatprep.subr.mxu0 0.0
        %1243 = vmatpush1.msra.mxu0 0.0
        %1244 = vmatprep.subr.mxu0 0.0
        %1245 = vmatpush1.msra.mxu0 0.0
        %1246 = vmatprep.subr.mxu0 0.0
        %1247 = vmatpush1.msra.mxu0 0.0
        %1248 = vmatprep.subr.mxu0 0.0
        %1249 = vmatpush1.msra.mxu0 0.0
        %1250 = vmatprep.subr.mxu0 0.0
        %1251 = vmatpush1.msra.mxu0 0.0
        %1252 = vmatprep.subr.mxu0 0.0
        %1253 = vmatpush1.msra.mxu0 0.0
        %1254 = vmatprep.subr.mxu0 0.0
        %1255 = vmatpush1.msra.mxu0 0.0
        %1256 = vmatprep.subr.mxu0 0.0
        %1257 = vmatpush1.msra.mxu0 0.0
        %1258 = vmatprep.subr.mxu0 0.0
        %1259 = vmatpush1.msra.mxu0 0.0
        %1260 = vmatprep.subr.mxu0 0.0
        %1261 = vmatpush1.msra.mxu0 0.0
        %1262 = vmatprep.subr.mxu0 0.0
        %1263 = vmatpush1.msra.mxu0 0.0
        %1264 = vmatprep.subr.mxu0 0.0
        %1265 = vmatpush1.msra.mxu0 0.0
        %1266 = vmatprep.subr.mxu0 0.0
        %1267 = vmatpush1.msra.mxu0 %v1234
        %1268 = vmatprep.subr.mxu0 0.0
        %1269 = vmatpush2.msra.mxu0 0.0
        %1270 = vmatprep.subr.mxu0 0.0
        %1271 = vmatpush2.msra.mxu0 0.0
        %1272 = vmatprep.subr.mxu0 0.0
        %1273 = vmatpush2.msra.mxu0 0.0
        %1274 = vmatprep.subr.mxu0 0.0
        %1275 = vmatpush2.msra.mxu0 0.0
        %1276 = vmatprep.subr.mxu0 0.0
        %1277 = vmatpush2.msra.mxu0 0.0
        %1278 = vmatprep.subr.mxu0 0.0
        %1279 = vmatpush2.msra.mxu0 0.0
        %1280 = vmatprep.subr.mxu0 0.0
        %1281 = vmatpush2.msra.mxu0 0.0
        %1282 = vmatprep.subr.mxu0 0.0
        %1283 = vmatpush2.msra.mxu0 0.0
        %1284 = vmatprep.subr.mxu0 0.0
        %1285 = vmatpush2.msra.mxu0 0.0
        %1286 = vmatprep.subr.mxu0 0.0
        %1287 = vmatpush2.msra.mxu0 0.0
        %1288 = vmatprep.subr.mxu0 0.0
        %1289 = vmatpush2.msra.mxu0 0.0
        %1290 = vmatprep.subr.mxu0 0.0
        %1291 = vmatpush2.msra.mxu0 0.0
        %1292 = vmatprep.subr.mxu0 0.0
        %1293 = vmatpush2.msra.mxu0 0.0
        %1294 = vmatprep.subr.mxu0 0.0
        %1295 = vmatpush2.msra.mxu0 0.0
        %1296 = vmatprep.subr.mxu0 0.0
        %1297 = vmatpush2.msra.mxu0 0.0
        %1298 = vmatprep.subr.mxu0 0.0
        %1299 = vmatpush2.msra.mxu0 0.0
        %1300 = vmatprep.mubr.f32.mxu0 0.0
        %1301 = vmatmul.mubr.f32.gmra.mxu0 %v1231
        %v1302 = vpop.f32.mrf.mxu0
        %v1303 = vadd.f32 0.0, %v1302
        %v1304 = vpop.f32.mrf.mxu0
        %1305 = vdwg.mxu0
        %v1306 = vadd.f32 %v1225, %v1303
        %s1307 = scalar_lea.vmem %s220, 52 [#allocation2]
        %v1308 = vld [vmem:[%s1307] sm:$0xf]
        %s1309 = scalar_lea.vmem [#allocation5], 52
        %v1310 = vld [vmem:[%s1309] sm:$0xf]
        %v1312 = vsel %vm256, %v1308, 0
        %v1315 = vsel %vm260, %v1310, 0
        %1317 = vmatprep.subr.mxu0 0.0
        %1318 = vmatpush1.msra.mxu0 0.0
        %1319 = vmatprep.subr.mxu0 0.0
        %1320 = vmatpush1.msra.mxu0 0.0
        %1321 = vmatprep.subr.mxu0 0.0
        %1322 = vmatpush1.msra.mxu0 0.0
        %1323 = vmatprep.subr.mxu0 0.0
        %1324 = vmatpush1.msra.mxu0 0.0
        %1325 = vmatprep.subr.mxu0 0.0
        %1326 = vmatpush1.msra.mxu0 0.0
        %1327 = vmatprep.subr.mxu0 0.0
        %1328 = vmatpush1.msra.mxu0 0.0
        %1329 = vmatprep.subr.mxu0 0.0
        %1330 = vmatpush1.msra.mxu0 0.0
        %1331 = vmatprep.subr.mxu0 0.0
        %1332 = vmatpush1.msra.mxu0 0.0
        %1333 = vmatprep.subr.mxu0 0.0
        %1334 = vmatpush1.msra.mxu0 0.0
        %1335 = vmatprep.subr.mxu0 0.0
        %1336 = vmatpush1.msra.mxu0 0.0
        %1337 = vmatprep.subr.mxu0 0.0
        %1338 = vmatpush1.msra.mxu0 0.0
        %1339 = vmatprep.subr.mxu0 0.0
        %1340 = vmatpush1.msra.mxu0 0.0
        %1341 = vmatprep.subr.mxu0 0.0
        %1342 = vmatpush1.msra.mxu0 0.0
        %1343 = vmatprep.subr.mxu0 0.0
        %1344 = vmatpush1.msra.mxu0 0.0
        %1345 = vmatprep.subr.mxu0 0.0
        %1346 = vmatpush1.msra.mxu0 0.0
        %1347 = vmatprep.subr.mxu0 0.0
        %1348 = vmatpush1.msra.mxu0 %v1315
        %1349 = vmatprep.subr.mxu0 0.0
        %1350 = vmatpush2.msra.mxu0 0.0
        %1351 = vmatprep.subr.mxu0 0.0
        %1352 = vmatpush2.msra.mxu0 0.0
        %1353 = vmatprep.subr.mxu0 0.0
        %1354 = vmatpush2.msra.mxu0 0.0
        %1355 = vmatprep.subr.mxu0 0.0
        %1356 = vmatpush2.msra.mxu0 0.0
        %1357 = vmatprep.subr.mxu0 0.0
        %1358 = vmatpush2.msra.mxu0 0.0
        %1359 = vmatprep.subr.mxu0 0.0
        %1360 = vmatpush2.msra.mxu0 0.0
        %1361 = vmatprep.subr.mxu0 0.0
        %1362 = vmatpush2.msra.mxu0 0.0
        %1363 = vmatprep.subr.mxu0 0.0
        %1364 = vmatpush2.msra.mxu0 0.0
        %1365 = vmatprep.subr.mxu0 0.0
        %1366 = vmatpush2.msra.mxu0 0.0
        %1367 = vmatprep.subr.mxu0 0.0
        %1368 = vmatpush2.msra.mxu0 0.0
        %1369 = vmatprep.subr.mxu0 0.0
        %1370 = vmatpush2.msra.mxu0 0.0
        %1371 = vmatprep.subr.mxu0 0.0
        %1372 = vmatpush2.msra.mxu0 0.0
        %1373 = vmatprep.subr.mxu0 0.0
        %1374 = vmatpush2.msra.mxu0 0.0
        %1375 = vmatprep.subr.mxu0 0.0
        %1376 = vmatpush2.msra.mxu0 0.0
        %1377 = vmatprep.subr.mxu0 0.0
        %1378 = vmatpush2.msra.mxu0 0.0
        %1379 = vmatprep.subr.mxu0 0.0
        %1380 = vmatpush2.msra.mxu0 0.0
        %1381 = vmatprep.mubr.f32.mxu0 0.0
        %1382 = vmatmul.mubr.f32.gmra.mxu0 %v1312
        %v1383 = vpop.f32.mrf.mxu0
        %v1384 = vadd.f32 0.0, %v1383
        %v1385 = vpop.f32.mrf.mxu0
        %1386 = vdwg.mxu0
        %v1387 = vadd.f32 %v1306, %v1384
        %s1388 = scalar_lea.vmem %s220, 56 [#allocation2]
        %v1389 = vld [vmem:[%s1388] sm:$0xf]
        %s1390 = scalar_lea.vmem [#allocation5], 56
        %v1391 = vld [vmem:[%s1390] sm:$0xf]
        %v1393 = vsel %vm256, %v1389, 0
        %v1396 = vsel %vm260, %v1391, 0
        %1398 = vmatprep.subr.mxu0 0.0
        %1399 = vmatpush1.msra.mxu0 0.0
        %1400 = vmatprep.subr.mxu0 0.0
        %1401 = vmatpush1.msra.mxu0 0.0
        %1402 = vmatprep.subr.mxu0 0.0
        %1403 = vmatpush1.msra.mxu0 0.0
        %1404 = vmatprep.subr.mxu0 0.0
        %1405 = vmatpush1.msra.mxu0 0.0
        %1406 = vmatprep.subr.mxu0 0.0
        %1407 = vmatpush1.msra.mxu0 0.0
        %1408 = vmatprep.subr.mxu0 0.0
        %1409 = vmatpush1.msra.mxu0 0.0
        %1410 = vmatprep.subr.mxu0 0.0
        %1411 = vmatpush1.msra.mxu0 0.0
        %1412 = vmatprep.subr.mxu0 0.0
        %1413 = vmatpush1.msra.mxu0 0.0
        %1414 = vmatprep.subr.mxu0 0.0
        %1415 = vmatpush1.msra.mxu0 0.0
        %1416 = vmatprep.subr.mxu0 0.0
        %1417 = vmatpush1.msra.mxu0 0.0
        %1418 = vmatprep.subr.mxu0 0.0
        %1419 = vmatpush1.msra.mxu0 0.0
        %1420 = vmatprep.subr.mxu0 0.0
        %1421 = vmatpush1.msra.mxu0 0.0
        %1422 = vmatprep.subr.mxu0 0.0
        %1423 = vmatpush1.msra.mxu0 0.0
        %1424 = vmatprep.subr.mxu0 0.0
        %1425 = vmatpush1.msra.mxu0 0.0
        %1426 = vmatprep.subr.mxu0 0.0
        %1427 = vmatpush1.msra.mxu0 0.0
        %1428 = vmatprep.subr.mxu0 0.0
        %1429 = vmatpush1.msra.mxu0 %v1396
        %1430 = vmatprep.subr.mxu0 0.0
        %1431 = vmatpush2.msra.mxu0 0.0
        %1432 = vmatprep.subr.mxu0 0.0
        %1433 = vmatpush2.msra.mxu0 0.0
        %1434 = vmatprep.subr.mxu0 0.0
        %1435 = vmatpush2.msra.mxu0 0.0
        %1436 = vmatprep.subr.mxu0 0.0
        %1437 = vmatpush2.msra.mxu0 0.0
        %1438 = vmatprep.subr.mxu0 0.0
        %1439 = vmatpush2.msra.mxu0 0.0
        %1440 = vmatprep.subr.mxu0 0.0
        %1441 = vmatpush2.msra.mxu0 0.0
        %1442 = vmatprep.subr.mxu0 0.0
        %1443 = vmatpush2.msra.mxu0 0.0
        %1444 = vmatprep.subr.mxu0 0.0
        %1445 = vmatpush2.msra.mxu0 0.0
        %1446 = vmatprep.subr.mxu0 0.0
        %1447 = vmatpush2.msra.mxu0 0.0
        %1448 = vmatprep.subr.mxu0 0.0
        %1449 = vmatpush2.msra.mxu0 0.0
        %1450 = vmatprep.subr.mxu0 0.0
        %1451 = vmatpush2.msra.mxu0 0.0
        %1452 = vmatprep.subr.mxu0 0.0
        %1453 = vmatpush2.msra.mxu0 0.0
        %1454 = vmatprep.subr.mxu0 0.0
        %1455 = vmatpush2.msra.mxu0 0.0
        %1456 = vmatprep.subr.mxu0 0.0
        %1457 = vmatpush2.msra.mxu0 0.0
        %1458 = vmatprep.subr.mxu0 0.0
        %1459 = vmatpush2.msra.mxu0 0.0
        %1460 = vmatprep.subr.mxu0 0.0
        %1461 = vmatpush2.msra.mxu0 0.0
        %1462 = vmatprep.mubr.f32.mxu0 0.0
        %1463 = vmatmul.mubr.f32.gmra.mxu0 %v1393
        %v1464 = vpop.f32.mrf.mxu0
        %v1465 = vadd.f32 0.0, %v1464
        %v1466 = vpop.f32.mrf.mxu0
        %1467 = vdwg.mxu0
        %v1468 = vadd.f32 %v1387, %v1465
        %s1469 = scalar_lea.vmem %s220, 60 [#allocation2]
        %v1470 = vld [vmem:[%s1469] sm:$0xf]
        %s1471 = scalar_lea.vmem [#allocation5], 60
        %v1472 = vld [vmem:[%s1471] sm:$0xf]
        %v1474 = vsel %vm256, %v1470, 0
        %v1477 = vsel %vm260, %v1472, 0
        %1479 = vmatprep.subr.mxu0 0.0
        %1480 = vmatpush1.msra.mxu0 0.0
        %1481 = vmatprep.subr.mxu0 0.0
        %1482 = vmatpush1.msra.mxu0 0.0
        %1483 = vmatprep.subr.mxu0 0.0
        %1484 = vmatpush1.msra.mxu0 0.0
        %1485 = vmatprep.subr.mxu0 0.0
        %1486 = vmatpush1.msra.mxu0 0.0
        %1487 = vmatprep.subr.mxu0 0.0
        %1488 = vmatpush1.msra.mxu0 0.0
        %1489 = vmatprep.subr.mxu0 0.0
        %1490 = vmatpush1.msra.mxu0 0.0
        %1491 = vmatprep.subr.mxu0 0.0
        %1492 = vmatpush1.msra.mxu0 0.0
        %1493 = vmatprep.subr.mxu0 0.0
        %1494 = vmatpush1.msra.mxu0 0.0
        %1495 = vmatprep.subr.mxu0 0.0
        %1496 = vmatpush1.msra.mxu0 0.0
        %1497 = vmatprep.subr.mxu0 0.0
        %1498 = vmatpush1.msra.mxu0 0.0
        %1499 = vmatprep.subr.mxu0 0.0
        %1500 = vmatpush1.msra.mxu0 0.0
        %1501 = vmatprep.subr.mxu0 0.0
        %1502 = vmatpush1.msra.mxu0 0.0
        %1503 = vmatprep.subr.mxu0 0.0
        %1504 = vmatpush1.msra.mxu0 0.0
        %1505 = vmatprep.subr.mxu0 0.0
        %1506 = vmatpush1.msra.mxu0 0.0
        %1507 = vmatprep.subr.mxu0 0.0
        %1508 = vmatpush1.msra.mxu0 0.0
        %1509 = vmatprep.subr.mxu0 0.0
        %1510 = vmatpush1.msra.mxu0 %v1477
        %1511 = vmatprep.subr.mxu0 0.0
        %1512 = vmatpush2.msra.mxu0 0.0
        %1513 = vmatprep.subr.mxu0 0.0
        %1514 = vmatpush2.msra.mxu0 0.0
        %1515 = vmatprep.subr.mxu0 0.0
        %1516 = vmatpush2.msra.mxu0 0.0
        %1517 = vmatprep.subr.mxu0 0.0
        %1518 = vmatpush2.msra.mxu0 0.0
        %1519 = vmatprep.subr.mxu0 0.0
        %1520 = vmatpush2.msra.mxu0 0.0
        %1521 = vmatprep.subr.mxu0 0.0
        %1522 = vmatpush2.msra.mxu0 0.0
        %1523 = vmatprep.subr.mxu0 0.0
        %1524 = vmatpush2.msra.mxu0 0.0
        %1525 = vmatprep.subr.mxu0 0.0
        %1526 = vmatpush2.msra.mxu0 0.0
        %1527 = vmatprep.subr.mxu0 0.0
        %1528 = vmatpush2.msra.mxu0 0.0
        %1529 = vmatprep.subr.mxu0 0.0
        %1530 = vmatpush2.msra.mxu0 0.0
        %1531 = vmatprep.subr.mxu0 0.0
        %1532 = vmatpush2.msra.mxu0 0.0
        %1533 = vmatprep.subr.mxu0 0.0
        %1534 = vmatpush2.msra.mxu0 0.0
        %1535 = vmatprep.subr.mxu0 0.0
        %1536 = vmatpush2.msra.mxu0 0.0
        %1537 = vmatprep.subr.mxu0 0.0
        %1538 = vmatpush2.msra.mxu0 0.0
        %1539 = vmatprep.subr.mxu0 0.0
        %1540 = vmatpush2.msra.mxu0 0.0
        %1541 = vmatprep.subr.mxu0 0.0
        %1542 = vmatpush2.msra.mxu0 0.0
        %1543 = vmatprep.mubr.f32.mxu0 0.0
        %1544 = vmatmul.mubr.f32.gmra.mxu0 %v1474
        %v1545 = vpop.f32.mrf.mxu0
        %v1546 = vadd.f32 0.0, %v1545
        %v1547 = vpop.f32.mrf.mxu0
        %1548 = vdwg.mxu0
        %v1549 = vadd.f32 %v1468, %v1546
        %1550 = vst [vmem:[%s246] sm:$0xf] %v1549
        %s1551 = sand.u32 %s113, 1
        %s1552 = scalar_lea.sflag [#allocation4], %s1551
        %s1553 = sand.u32 %s113, 1
        %s1554 = smul.addr %s1553, 4
        %s1555 = scalar_lea.vmem [#allocation7], %s1554
        // Predicated region
        $region41: #{tpu_custom_call.1} parent=31 // pred_check
          %p1556 = pneg %p123
        $region42: #{tpu_custom_call.1} parent=31 // pred_check_branch
          %1558 = sbr.rel (%p1556) target = $region44
        $region43: #{tpu_custom_call.1} parent=31 // pred_region
          %s1560 = ssub.s32 64, 64
          %1561 = vsyncadd %s1552, %s1560
          %s1562 = smul.addr %s25, 4
          %s1563 = sadd.s32 %s26, %s1562
          %s1564 = smul.addr %s1563, 64
          %s1565 = scalar_lea.hbm %s3, %s1564
          %s1567 = sshll.u32 %s1555, 4
          %s1568 = int_to_ptr.vmem [resolvable:$true] %s1567
          %1570 = dma.vmem_to_hbm [thread:$0]  %s1568, 64, %s1565, %s1552
        $region44: #{tpu_custom_call.1} parent=31 // pred_fallthru
          _
      $region32: #{tpu_custom_call.1} parent=5 // pred_fallthru
        _
      %p1571 = scmp.le.s32.totalorder 2, %s16
      // Predicated region
      $region45: #{tpu_custom_call.1} parent=5 // pred_check
        %p1572 = pneg %p1571
      $region46: #{tpu_custom_call.1} parent=5 // pred_check_branch
        %1574 = sbr.rel (%p1572) target = $region48
      $region47: #{tpu_custom_call.1} parent=5 // pred_region
        %s1575 = ssub.s32 %s16, 2
        // Predicated region
        $region49: #{tpu_custom_call.1} parent=47 // pred_check
          %p1576 = pneg %p129
        $region50: #{tpu_custom_call.1} parent=47 // pred_check_branch
          %1578 = sbr.rel (%p1576) target = $region52
        $region51: #{tpu_custom_call.1} parent=47 // pred_region
          %s1579 = sand.u32 %s114, 1
          %s1580 = scalar_lea.sflag [#allocation4], %s1579
          %s1581 = sand.u32 %s114, 1
          %s1582 = smul.addr %s1581, 4
          %s1583 = scalar_lea.vmem [#allocation7], %s1582
          %1584 = dma.done %s1580, 64
        $region52: #{tpu_custom_call.1} parent=47 // pred_fallthru
          _
      $region48: #{tpu_custom_call.1} parent=5 // pred_fallthru
        _
    $region6: #{tpu_custom_call.1} parent=1 // loop_footer
      %s20 = sadd.s32 1, %s16
    $region7: #{tpu_custom_call.1} parent=1 // loop_footer_branch
      %15 = sbr.rel target = $region3
    $region8: #{tpu_custom_call.1} parent=1 // loop_exit
      _
    %1585 = vsyncpa [#allocation3], 1
    %s1586 = scalar_lea.sflag [#allocation3], 1
    %1587 = vsyncpa %s1586, 1
    %1588 = vsyncpa [#allocation6], 1
    %1589 = vsyncpa [#allocation4], 1
    %s1590 = scalar_lea.sflag [#allocation4], 1
    %1591 = vsyncpa %s1590, 1

</llo_original>
